<compile_context>
chip_gen: v7x
topology: tpu7x:2x2x1
jax: 0.10.0
libtpu: 0.0.40
codegen_flags: <defaults>
</compile_context>

<pallas_src>
import math
import jax
import jax.numpy as jnp
from jax.experimental import pallas as pl
from jax.experimental.pallas import tpu as pltpu

PAD = 128  # lane-dense padded feature width for hidden/output layers
_PRECISION = jax.lax.Precision.HIGHEST


def _round_up(n, m):
    return ((n + m - 1) // m) * m


def qnetwork_kernel(x_ref, w1_ref, w_ref, b_ref, o_ref):
    # Whole 4-layer MLP fused; weight/bias slabs are grid-invariant and stay
    # VMEM-resident across batch tiles.  Static slab indices (w_ref[l]) are free.
    x = x_ref[...]                                           # (bt, state_size)
    h = jnp.dot(x, w1_ref[...], preferred_element_type=jnp.float32,
                precision=_PRECISION) + b_ref[0]
    h = jnp.maximum(h, 0.0)
    for l in range(3):                                       # layers 2, 3, 4
        h = jnp.dot(h, w_ref[l], preferred_element_type=jnp.float32,
                    precision=_PRECISION) + b_ref[l + 1]
        if l < 2:                                            # no ReLU on layer 4
            h = jnp.maximum(h, 0.0)
    o_ref[...] = h.astype(o_ref.dtype)


def qnetwork_forward(x, w1, w_rest, b_slab, action_size, block_batch=2048):
    """x: (batch, state_size) fp32.  Returns (batch, action_size) fp32."""
    batch, state_size = x.shape
    feat = w_rest.shape[-1]  # 128

    # --- batch tiling -------------------------------------------------------
    # num_tiles first, then size the tile to the actual batch so the last tile
    # wastes at most 7 rows.  block_batch is a tunable; at 2048 each x/out tile
    # is ~(72 KiB + 1 MiB) double-buffered + ~200 KiB of weights, well under
    # even v5e's 16 MiB scoped-VMEM default (raise vmem_limit_bytes if swept
    # higher).
    num_tiles = max(1, pl.cdiv(batch, block_batch))
    if num_tiles == 1 and batch > 1024:
        num_tiles = 2  # let v7x's second TensorCore pick up a tile
    bt = _round_up(pl.cdiv(batch, num_tiles), 8)
    padded_batch = num_tiles * bt

    # Cheap batch-dim pad only (rows are state_size wide, not 128).  Padded
    # rows are deterministic zero inputs -> bias-propagated values, sliced off.
    if padded_batch != batch:
        xp = jnp.pad(x, ((0, padded_batch - batch), (0, 0)))
    else:
        xp = x

    cost = pl.CostEstimate(
        flops=2 * padded_batch * (state_size * feat + 3 * feat * feat),
        transcendentals=0,
        bytes_accessed=4 * (xp.size + padded_batch * feat
                            + w1.size + w_rest.size + b_slab.size),
    )

    out_padded = pl.pallas_call(
        qnetwork_kernel,
        out_shape=jax.ShapeDtypeStruct((padded_batch, feat), jnp.float32),
        grid=(num_tiles,),
        in_specs=[
            # x tile: natural last dim (== full array dim), batch-tiled.
            pl.BlockSpec((bt, state_size), lambda i: (i, 0)),
            # grid-invariant params: constant index_map + single-buffered.
            pl.BlockSpec((state_size, feat), lambda i: (0, 0),
                         pipeline_mode=pl.Buffered(1)),
            pl.BlockSpec((3, feat, feat), lambda i: (0, 0, 0),
                         pipeline_mode=pl.Buffered(1)),
            pl.BlockSpec((4, 1, feat), lambda i: (0, 0, 0),
                         pipeline_mode=pl.Buffered(1)),
        ],
        out_specs=pl.BlockSpec((bt, feat), lambda i: (i, 0)),
        compiler_params=pltpu.CompilerParams(
            dimension_semantics=("parallel",),
        ),
        cost_estimate=cost,
    )(xp, w1, w_rest, b_slab)

    return out_padded[:batch, :action_size]


def _init_linear(key, fan_in, fan_out):
    """nn.Linear-style uniform(-1/sqrt(fan_in), 1/sqrt(fan_in)) init,
    returned transposed (in, out) plus the bias."""
    kw, kb = jax.random.split(key)
    bound = 1.0 / math.sqrt(fan_in)
    w = jax.random.uniform(kw, (fan_in, fan_out), jnp.float32, -bound, bound)
    b = jax.random.uniform(kb, (fan_out,), jnp.float32, -bound, bound)
    return w, b


def make_params(key, state_size=9, action_size=9, hidden_size=10):
    """Packed, padded parameters:
         w1     f32[state_size, 128]   (layer-1 weight, input dim unpadded)
         w_rest f32[3, 128, 128]       (layers 2-4, zero-padded)
         b_slab f32[4, 1, 128]         (all biases, zero-padded)
    Zero padding is semantics-preserving (ReLU(0)=0, zero rows/cols add 0)."""
    k1, k2, k3, k4 = jax.random.split(key, 4)

    w, b = _init_linear(k1, state_size, hidden_size)
    w1 = jnp.zeros((state_size, PAD), jnp.float32).at[:, :hidden_size].set(w)
    biases = [jnp.zeros((1, PAD), jnp.float32).at[0, :hidden_size].set(b)]

    w_rest = []
    for k, (fi, fo) in zip((k2, k3, k4),
                           [(hidden_size, hidden_size),
                            (hidden_size, hidden_size),
                            (hidden_size, action_size)]):
        w, b = _init_linear(k, fi, fo)
        w_rest.append(jnp.zeros((PAD, PAD), jnp.float32).at[:fi, :fo].set(w))
        biases.append(jnp.zeros((1, PAD), jnp.float32).at[0, :fo].set(b))

    return w1, jnp.stack(w_rest), jnp.stack(biases)


def reference_forward(x, w1, w_rest, b_slab, action_size):
    """Pure-JAX reference on the same (padded) parameters, same precision."""
    h = jnp.maximum(jnp.dot(x, w1, precision=_PRECISION) + b_slab[0], 0.0)
    h = jnp.maximum(jnp.dot(h, w_rest[0], precision=_PRECISION) + b_slab[1], 0.0)
    h = jnp.maximum(jnp.dot(h, w_rest[1], precision=_PRECISION) + b_slab[2], 0.0)
    out = jnp.dot(h, w_rest[2], precision=_PRECISION) + b_slab[3]
    return out[:, :action_size]


if __name__ == "__main__":
    state_size, action_size, hidden_size = 9, 9, 10
    batch = 4

    key = jax.random.PRNGKey(0)
    kx, kp = jax.random.split(key)
    x = jax.random.normal(kx, (batch, state_size), jnp.float32)
    w1, w_rest, b_slab = make_params(kp, state_size, action_size, hidden_size)

    out = qnetwork_forward(x, w1, w_rest, b_slab, action_size)
    out = jax.block_until_ready(out)

    ref = reference_forward(x, w1, w_rest, b_slab, action_size)
    assert out.shape == (batch, action_size)
    assert jnp.allclose(out, ref, atol=1e-5, rtol=1e-5)

    print("KERNEL_OK")
</pallas_src>

<mosaic_0001>
module attributes {stable_mosaic.version = 11 : i64} {
  func.func @qnetwork_kernel(%arg0: i32, %arg1: memref<8x9xf32, #tpu.memory_space<vmem>>, %arg2: memref<9x128xf32, #tpu.memory_space<vmem>>, %arg3: memref<3x128x128xf32, #tpu.memory_space<vmem>>, %arg4: memref<4x1x128xf32, #tpu.memory_space<vmem>>, %arg5: memref<8x128xf32, #tpu.memory_space<vmem>>) attributes {dimension_semantics = [#tpu.dimension_semantics<parallel>], iteration_bounds = array<i64: 1>, scalar_prefetch = 0 : i64, scratch_operands = 0 : i64, tpu.core_type = #tpu.core_type<tc>, window_params = [{transform_indices = @transform_0, window_bounds = array<i64: 8, 9>}, {pipeline_mode = #tpu.pipeline_mode<synchronous>, transform_indices = @transform_1, window_bounds = array<i64: 9, 128>}, {pipeline_mode = #tpu.pipeline_mode<synchronous>, transform_indices = @transform_2, window_bounds = array<i64: 3, 128, 128>}, {pipeline_mode = #tpu.pipeline_mode<synchronous>, transform_indices = @transform_3, window_bounds = array<i64: 4, 1, 128>}, {transform_indices = @transform_4, window_bounds = array<i64: 8, 128>}]} {
    %c0 = arith.constant 0 : index
    %c0_0 = arith.constant 0 : index
    %0 = vector.load %arg1[%c0, %c0_0] : memref<8x9xf32, #tpu.memory_space<vmem>>, vector<8x9xf32>
    %c0_1 = arith.constant 0 : index
    %c0_2 = arith.constant 0 : index
    %1 = vector.load %arg2[%c0_1, %c0_2] : memref<9x128xf32, #tpu.memory_space<vmem>>, vector<9x128xf32>
    %cst = arith.constant dense<0.000000e+00> : vector<8x128xf32>
    %2 = tpu.matmul %0, %1, %cst {dimension_numbers = #tpu.dot_dimension_numbers<[1], [0], [0], [1], [0, 0, 1, 1], [], []>, precision = #tpu.contract_precision<fp32>} : vector<8x9xf32>, vector<9x128xf32>, vector<8x128xf32> -> vector<8x128xf32>
    %c0_3 = arith.constant 0 : index
    %c0_4 = arith.constant 0 : index
    %c0_5 = arith.constant 0 : index
    %3 = vector.load %arg4[%c0_3, %c0_4, %c0_5] : memref<4x1x128xf32, #tpu.memory_space<vmem>>, vector<1x1x128xf32>
    %4 = vector.shape_cast %3 : vector<1x1x128xf32> to vector<1x128xf32>
    %5 = vector.broadcast %4 : vector<1x128xf32> to vector<8x128xf32>
    %6 = arith.addf %2, %5 : vector<8x128xf32>
    %cst_6 = arith.constant 0.000000e+00 : f32
    %7 = vector.broadcast %cst_6 : f32 to vector<8x128xf32>
    %8 = arith.maximumf %6, %7 : vector<8x128xf32>
    %c0_7 = arith.constant 0 : index
    %c0_8 = arith.constant 0 : index
    %c0_9 = arith.constant 0 : index
    %9 = vector.load %arg3[%c0_7, %c0_8, %c0_9] : memref<3x128x128xf32, #tpu.memory_space<vmem>>, vector<1x128x128xf32>
    %10 = vector.shape_cast %9 : vector<1x128x128xf32> to vector<128x128xf32>
    %cst_10 = arith.constant dense<0.000000e+00> : vector<8x128xf32>
    %11 = tpu.matmul %8, %10, %cst_10 {dimension_numbers = #tpu.dot_dimension_numbers<[1], [0], [0], [1], [0, 0, 1, 1], [], []>, precision = #tpu.contract_precision<fp32>} : vector<8x128xf32>, vector<128x128xf32>, vector<8x128xf32> -> vector<8x128xf32>
    %c1 = arith.constant 1 : index
    %c0_11 = arith.constant 0 : index
    %c0_12 = arith.constant 0 : index
    %12 = vector.load %arg4[%c1, %c0_11, %c0_12] : memref<4x1x128xf32, #tpu.memory_space<vmem>>, vector<1x1x128xf32>
    %13 = vector.shape_cast %12 : vector<1x1x128xf32> to vector<1x128xf32>
    %14 = vector.broadcast %13 : vector<1x128xf32> to vector<8x128xf32>
    %15 = arith.addf %11, %14 : vector<8x128xf32>
    %cst_13 = arith.constant 0.000000e+00 : f32
    %16 = vector.broadcast %cst_13 : f32 to vector<8x128xf32>
    %17 = arith.maximumf %15, %16 : vector<8x128xf32>
    %c1_14 = arith.constant 1 : index
    %c0_15 = arith.constant 0 : index
    %c0_16 = arith.constant 0 : index
    %18 = vector.load %arg3[%c1_14, %c0_15, %c0_16] : memref<3x128x128xf32, #tpu.memory_space<vmem>>, vector<1x128x128xf32>
    %19 = vector.shape_cast %18 : vector<1x128x128xf32> to vector<128x128xf32>
    %cst_17 = arith.constant dense<0.000000e+00> : vector<8x128xf32>
    %20 = tpu.matmul %17, %19, %cst_17 {dimension_numbers = #tpu.dot_dimension_numbers<[1], [0], [0], [1], [0, 0, 1, 1], [], []>, precision = #tpu.contract_precision<fp32>} : vector<8x128xf32>, vector<128x128xf32>, vector<8x128xf32> -> vector<8x128xf32>
    %c2 = arith.constant 2 : index
    %c0_18 = arith.constant 0 : index
    %c0_19 = arith.constant 0 : index
    %21 = vector.load %arg4[%c2, %c0_18, %c0_19] : memref<4x1x128xf32, #tpu.memory_space<vmem>>, vector<1x1x128xf32>
    %22 = vector.shape_cast %21 : vector<1x1x128xf32> to vector<1x128xf32>
    %23 = vector.broadcast %22 : vector<1x128xf32> to vector<8x128xf32>
    %24 = arith.addf %20, %23 : vector<8x128xf32>
    %cst_20 = arith.constant 0.000000e+00 : f32
    %25 = vector.broadcast %cst_20 : f32 to vector<8x128xf32>
    %26 = arith.maximumf %24, %25 : vector<8x128xf32>
    %c2_21 = arith.constant 2 : index
    %c0_22 = arith.constant 0 : index
    %c0_23 = arith.constant 0 : index
    %27 = vector.load %arg3[%c2_21, %c0_22, %c0_23] : memref<3x128x128xf32, #tpu.memory_space<vmem>>, vector<1x128x128xf32>
    %28 = vector.shape_cast %27 : vector<1x128x128xf32> to vector<128x128xf32>
    %cst_24 = arith.constant dense<0.000000e+00> : vector<8x128xf32>
    %29 = tpu.matmul %26, %28, %cst_24 {dimension_numbers = #tpu.dot_dimension_numbers<[1], [0], [0], [1], [0, 0, 1, 1], [], []>, precision = #tpu.contract_precision<fp32>} : vector<8x128xf32>, vector<128x128xf32>, vector<8x128xf32> -> vector<8x128xf32>
    %c3 = arith.constant 3 : index
    %c0_25 = arith.constant 0 : index
    %c0_26 = arith.constant 0 : index
    %30 = vector.load %arg4[%c3, %c0_25, %c0_26] : memref<4x1x128xf32, #tpu.memory_space<vmem>>, vector<1x1x128xf32>
    %31 = vector.shape_cast %30 : vector<1x1x128xf32> to vector<1x128xf32>
    %32 = vector.broadcast %31 : vector<1x128xf32> to vector<8x128xf32>
    %33 = arith.addf %29, %32 : vector<8x128xf32>
    %c0_27 = arith.constant 0 : index
    %c0_28 = arith.constant 0 : index
    %34 = vector.load %arg5[%c0_27, %c0_28] : memref<8x128xf32, #tpu.memory_space<vmem>>, vector<8x128xf32>
    tpu.vector_store %arg5[%c0_27, %c0_28], %33 {strides = array<i32>} : memref<8x128xf32, #tpu.memory_space<vmem>>, vector<8x128xf32>,
    return
  }
  func.func @transform_0(%arg0: i32) -> (i32, i32) {
    %c0_i32 = arith.constant 0 : i32
    %c0_i32_0 = arith.constant 0 : i32
    return %arg0, %c0_i32 : i32, i32
  }
  func.func @transform_1(%arg0: i32) -> (i32, i32) {
    %c0_i32 = arith.constant 0 : i32
    %c0_i32_0 = arith.constant 0 : i32
    %c0_i32_1 = arith.constant 0 : i32
    return %c0_i32, %c0_i32_0 : i32, i32
  }
  func.func @transform_2(%arg0: i32) -> (i32, i32, i32) {
    %c0_i32 = arith.constant 0 : i32
    %c0_i32_0 = arith.constant 0 : i32
    %c0_i32_1 = arith.constant 0 : i32
    %c0_i32_2 = arith.constant 0 : i32
    return %c0_i32, %c0_i32_0, %c0_i32_1 : i32, i32, i32
  }
  func.func @transform_3(%arg0: i32) -> (i32, i32, i32) {
    %c0_i32 = arith.constant 0 : i32
    %c0_i32_0 = arith.constant 0 : i32
    %c0_i32_1 = arith.constant 0 : i32
    %c0_i32_2 = arith.constant 0 : i32
    return %c0_i32, %c0_i32_0, %c0_i32_1 : i32, i32, i32
  }
  func.func @transform_4(%arg0: i32) -> (i32, i32) {
    %c0_i32 = arith.constant 0 : i32
    %c0_i32_0 = arith.constant 0 : i32
    return %arg0, %c0_i32 : i32, i32
  }
}

</mosaic_0001>

<llo_original>
// kernel: tpu_custom_call.1
$region0: #{tpu_custom_call.1}
  #allocation0 [shape = 'u32[]', space=smem, size = 0x4, offset = 0x4, fixed_abs, tag = 'smem constant byte address 0x4 - core index']
  #allocation1 [shape = 'u32[144,128]{1,0:T(1,128)}', space=vmem, size = 0x12000, scoped, tag = 'internal scratch']
  %s0 = inlined_call_operand.hbm [shape: f32[8,9], index: 0, kind: input, shape index: {}]
  %s1 = inlined_call_operand.hbm [shape: f32[9,128], index: 1, kind: input, shape index: {}]
  %s2 = inlined_call_operand.hbm [shape: f32[3,128,128], index: 2, kind: input, shape index: {}]
  %s3 = inlined_call_operand.vmem [shape: f32[4,1,128], index: 3, kind: input, shape index: {}]
  %s4 = inlined_call_operand.hbm [shape: f32[8,128], index: 4, kind: output, shape index: {}]
  %s5 = sld [smem:[#allocation0]]
  $region38: #{tpu_custom_call.1} parent=0
    _
  %s7 = ssub.s32 1, %s5
  %s8 = scalar_select 0, %s7, %s5
  $region1: #{tpu_custom_call.1} parent=0
    #allocation2 [shape = 'u8[4096]{0}', space=vmem, size = 0x1000, scoped, tag = 'input window, operand 0, single buffered']
    #allocation3 [shape = 's32[1]{0}', space=sflag, size = 0x4, scoped, tag = 'scoped memory for tpu_custom_call.1']
    #allocation4 [shape = 's32[1]{0}', space=sflag, size = 0x4, scoped, tag = 'scoped memory for tpu_custom_call.1']
    #allocation5 [shape = 'u8[8192]{0}', space=vmem, size = 0x2000, scoped, tag = 'input window, operand 1, single buffered']
    #allocation6 [shape = 's32[1]{0}', space=sflag, size = 0x4, scoped, tag = 'scoped memory for tpu_custom_call.1']
    #allocation7 [shape = 'u8[196608]{0}', space=vmem, size = 0x30000, scoped, tag = 'input window, operand 2, single buffered']
    #allocation8 [shape = 'u8[4096]{0}', space=vmem, size = 0x1000, scoped, tag = 'output window, operand 0, single buffered']
    %9 = vsyncpa [#allocation3], 0
    %10 = vsyncpa [#allocation6], 0
    %11 = vsyncpa [#allocation4], 0
    // Predicated region
    $region2: #{tpu_custom_call.1} parent=1 // pred_check
      _
    $region3: #{tpu_custom_call.1} parent=1 // pred_check_branch
      %13 = sbr.rel (0) target = $region5
    $region4: #{tpu_custom_call.1} parent=1 // pred_region
      %s15 = ssub.s32 128, 128
      %16 = vsyncadd [#allocation3], %s15
      %s18 = sshll.u32 [#allocation2], 4
      %s19 = int_to_ptr.vmem [resolvable:$true] %s18
      %21 = dma.hbm_to_vmem [thread:$0]  %s0, 128, %s19, [#allocation3]
    $region5: #{tpu_custom_call.1} parent=1 // pred_fallthru
      _
    // Predicated region
    $region6: #{tpu_custom_call.1} parent=1 // pred_check
      _
    $region7: #{tpu_custom_call.1} parent=1 // pred_check_branch
      %23 = sbr.rel (0) target = $region9
    $region8: #{tpu_custom_call.1} parent=1 // pred_region
      %s25 = ssub.s32 256, 256
      %26 = vsyncadd [#allocation6], %s25
      %s27 = sshll.u32 [#allocation5], 4
      %s28 = int_to_ptr.vmem [resolvable:$true] %s27
      %33 = dma.hbm_to_vmem [thread:$0]  %s1, 256, %s28, [#allocation6], 128, 128, 8
    $region9: #{tpu_custom_call.1} parent=1 // pred_fallthru
      _
    // Predicated region
    $region10: #{tpu_custom_call.1} parent=1 // pred_check
      _
    $region11: #{tpu_custom_call.1} parent=1 // pred_check_branch
      %35 = sbr.rel (0) target = $region13
    $region12: #{tpu_custom_call.1} parent=1 // pred_region
      %s37 = ssub.s32 6144, 6144
      %38 = vsyncadd [#allocation6], %s37
      %s39 = sshll.u32 [#allocation7], 4
      %s40 = int_to_ptr.vmem [resolvable:$true] %s39
      %45 = dma.hbm_to_vmem [thread:$0]  %s2, 6144, %s40, [#allocation6], 128, 128, 8
    $region13: #{tpu_custom_call.1} parent=1 // pred_fallthru
      _
    // Predicated region
    $region14: #{tpu_custom_call.1} parent=1 // pred_check
      _
    $region15: #{tpu_custom_call.1} parent=1 // pred_check_branch
      %47 = sbr.rel (0) target = $region17
    $region16: #{tpu_custom_call.1} parent=1 // pred_region
      _
    $region17: #{tpu_custom_call.1} parent=1 // pred_fallthru
      _
    // Predicated region
    $region18: #{tpu_custom_call.1} parent=1 // pred_check
      _
    $region19: #{tpu_custom_call.1} parent=1 // pred_check_branch
      %49 = sbr.rel (0) target = $region21
    $region20: #{tpu_custom_call.1} parent=1 // pred_region
      %50 = dma.done [#allocation3], 128
    $region21: #{tpu_custom_call.1} parent=1 // pred_fallthru
      _
    // Predicated region
    $region22: #{tpu_custom_call.1} parent=1 // pred_check
      _
    $region23: #{tpu_custom_call.1} parent=1 // pred_check_branch
      %52 = sbr.rel (0) target = $region25
    $region24: #{tpu_custom_call.1} parent=1 // pred_region
      %53 = dma.done [#allocation6], 256
    $region25: #{tpu_custom_call.1} parent=1 // pred_fallthru
      _
    // Predicated region
    $region26: #{tpu_custom_call.1} parent=1 // pred_check
      _
    $region27: #{tpu_custom_call.1} parent=1 // pred_check_branch
      %55 = sbr.rel (0) target = $region29
    $region28: #{tpu_custom_call.1} parent=1 // pred_region
      %56 = dma.done [#allocation6], 6144
    $region29: #{tpu_custom_call.1} parent=1 // pred_fallthru
      _
    %v57 = vld [vmem:[#allocation2] sm:$0xff]
    %v58 = vld [vmem:[#allocation5] sm:$0xff]
    %v59 = vld [vmem:[#allocation5 + $0x8] sm:$0x1]
    %v60 = vld [vmem:[%s3] sm:$0x1]
    %v62 = vlaneseq
    %v63 = vshrl.u32 %v62, 7
    %v64 = vsub.s32 0, %v63
    %v65 = vrot.slane %v60, %v64
    %vm67 = vcmask 72704
    %v69 = vsel %vm67, %v57, 0
    %vm71 = vcmask 1040384
    %v73 = vsel %vm71, %v59, 0
    %75 = vmatprep.subr.mxu0 0.0
    %v76 = vand.u32 %v58, 4294901760
    %77 = vmatpush1.msra.mxu0 %v76
    %78 = vmatprep.subr.mxu0 0.0
    %v79 = vand.u32 %v73, 4294901760
    %80 = vmatpush1.msra.mxu0 %v79
    %81 = vmatprep.subr.mxu0 0.0
    %82 = vmatpush1.msra.mxu0 0.0
    %83 = vmatprep.subr.mxu0 0.0
    %84 = vmatpush1.msra.mxu0 0.0
    %85 = vmatprep.subr.mxu0 0.0
    %86 = vmatpush1.msra.mxu0 0.0
    %87 = vmatprep.subr.mxu0 0.0
    %88 = vmatpush1.msra.mxu0 0.0
    %89 = vmatprep.subr.mxu0 0.0
    %90 = vmatpush1.msra.mxu0 0.0
    %91 = vmatprep.subr.mxu0 0.0
    %92 = vmatpush1.msra.mxu0 0.0
    %93 = vmatprep.subr.mxu0 0.0
    %94 = vmatpush1.msra.mxu0 0.0
    %95 = vmatprep.subr.mxu0 0.0
    %96 = vmatpush1.msra.mxu0 0.0
    %97 = vmatprep.subr.mxu0 0.0
    %98 = vmatpush1.msra.mxu0 0.0
    %99 = vmatprep.subr.mxu0 0.0
    %100 = vmatpush1.msra.mxu0 0.0
    %101 = vmatprep.subr.mxu0 0.0
    %102 = vmatpush1.msra.mxu0 0.0
    %103 = vmatprep.subr.mxu0 0.0
    %104 = vmatpush1.msra.mxu0 0.0
    %105 = vmatprep.subr.mxu0 0.0
    %106 = vmatpush1.msra.mxu0 0.0
    %107 = vmatprep.subr.mxu0 0.0
    %108 = vmatpush1.msra.mxu0 0.0
    %109 = vmatprep.subr.mxu0 0.0
    %110 = vmatpush1.msra.mxu0 0.0
    %111 = vmatprep.subr.mxu0 0.0
    %112 = vmatpush1.msra.mxu0 0.0
    %113 = vmatprep.subr.mxu0 0.0
    %114 = vmatpush1.msra.mxu0 0.0
    %115 = vmatprep.subr.mxu0 0.0
    %116 = vmatpush1.msra.mxu0 0.0
    %117 = vmatprep.subr.mxu0 0.0
    %118 = vmatpush1.msra.mxu0 0.0
    %119 = vmatprep.subr.mxu0 0.0
    %120 = vmatpush1.msra.mxu0 0.0
    %121 = vmatprep.subr.mxu0 0.0
    %122 = vmatpush1.msra.mxu0 0.0
    %123 = vmatprep.subr.mxu0 0.0
    %124 = vmatpush1.msra.mxu0 0.0
    %125 = vmatprep.subr.mxu0 0.0
    %126 = vmatpush1.msra.mxu0 0.0
    %127 = vmatprep.subr.mxu0 0.0
    %128 = vmatpush1.msra.mxu0 0.0
    %129 = vmatprep.subr.mxu0 0.0
    %130 = vmatpush1.msra.mxu0 0.0
    %131 = vmatprep.subr.mxu0 0.0
    %132 = vmatpush1.msra.mxu0 0.0
    %133 = vmatprep.subr.mxu0 0.0
    %134 = vmatpush1.msra.mxu0 0.0
    %135 = vmatprep.subr.mxu0 0.0
    %136 = vmatpush1.msra.mxu0 0.0
    %137 = vmatprep.subr.mxu0 0.0
    %138 = vmatpush1.msra.mxu0 0.0
    %139 = vmatprep.subr.mxu0 0.0
    %140 = vmatpush1.msra.mxu0 0.0
    %141 = vmatprep.mubr.f32.mxu0 0.0
    %v142 = vand.u32 %v69, 4294901760
    %v143 = vsub.f32 %v69, %v142
    %v144 = vand.u32 %v143, 4294901760
    %v145 = vsub.f32 %v143, %v144
    %v146 = vand.u32 %v145, 4294901760
    %147 = vmatmul.mubr.f32.gmra.mrb[0].mxu0 %v146
    %v148 = vpop.f32.mrb[0].mxu0
    %v149 = vadd.f32 %v65, %v148
    %v150 = vpop.f32.mrb[0].mxu0
    %151 = vdwg.mxu0
    %152 = vmatprep.subr.mxu0 0.0
    %v153 = vand.u32 %v58, 4294901760
    %v154 = vsub.f32 %v58, %v153
    %v155 = vand.u32 %v154, 4294901760
    %v156 = vsub.f32 %v154, %v155
    %v157 = vand.u32 %v156, 4294901760
    %158 = vmatpush1.msra.mxu0 %v157
    %159 = vmatprep.subr.mxu0 0.0
    %v160 = vand.u32 %v73, 4294901760
    %v161 = vsub.f32 %v73, %v160
    %v162 = vand.u32 %v161, 4294901760
    %v163 = vsub.f32 %v161, %v162
    %v164 = vand.u32 %v163, 4294901760
    %165 = vmatpush1.msra.mxu0 %v164
    %166 = vmatprep.subr.mxu0 0.0
    %167 = vmatpush1.msra.mxu0 0.0
    %168 = vmatprep.subr.mxu0 0.0
    %169 = vmatpush1.msra.mxu0 0.0
    %170 = vmatprep.subr.mxu0 0.0
    %171 = vmatpush1.msra.mxu0 0.0
    %172 = vmatprep.subr.mxu0 0.0
    %173 = vmatpush1.msra.mxu0 0.0
    %174 = vmatprep.subr.mxu0 0.0
    %175 = vmatpush1.msra.mxu0 0.0
    %176 = vmatprep.subr.mxu0 0.0
    %177 = vmatpush1.msra.mxu0 0.0
    %178 = vmatprep.subr.mxu0 0.0
    %179 = vmatpush1.msra.mxu0 0.0
    %180 = vmatprep.subr.mxu0 0.0
    %181 = vmatpush1.msra.mxu0 0.0
    %182 = vmatprep.subr.mxu0 0.0
    %183 = vmatpush1.msra.mxu0 0.0
    %184 = vmatprep.subr.mxu0 0.0
    %185 = vmatpush1.msra.mxu0 0.0
    %186 = vmatprep.subr.mxu0 0.0
    %187 = vmatpush1.msra.mxu0 0.0
    %188 = vmatprep.subr.mxu0 0.0
    %189 = vmatpush1.msra.mxu0 0.0
    %190 = vmatprep.subr.mxu0 0.0
    %191 = vmatpush1.msra.mxu0 0.0
    %192 = vmatprep.subr.mxu0 0.0
    %193 = vmatpush1.msra.mxu0 0.0
    %194 = vmatprep.subr.mxu0 0.0
    %195 = vmatpush1.msra.mxu0 0.0
    %196 = vmatprep.subr.mxu0 0.0
    %197 = vmatpush1.msra.mxu0 0.0
    %198 = vmatprep.subr.mxu0 0.0
    %199 = vmatpush1.msra.mxu0 0.0
    %200 = vmatprep.subr.mxu0 0.0
    %201 = vmatpush1.msra.mxu0 0.0
    %202 = vmatprep.subr.mxu0 0.0
    %203 = vmatpush1.msra.mxu0 0.0
    %204 = vmatprep.subr.mxu0 0.0
    %205 = vmatpush1.msra.mxu0 0.0
    %206 = vmatprep.subr.mxu0 0.0
    %207 = vmatpush1.msra.mxu0 0.0
    %208 = vmatprep.subr.mxu0 0.0
    %209 = vmatpush1.msra.mxu0 0.0
    %210 = vmatprep.subr.mxu0 0.0
    %211 = vmatpush1.msra.mxu0 0.0
    %212 = vmatprep.subr.mxu0 0.0
    %213 = vmatpush1.msra.mxu0 0.0
    %214 = vmatprep.subr.mxu0 0.0
    %215 = vmatpush1.msra.mxu0 0.0
    %216 = vmatprep.subr.mxu0 0.0
    %217 = vmatpush1.msra.mxu0 0.0
    %218 = vmatprep.subr.mxu0 0.0
    %219 = vmatpush1.msra.mxu0 0.0
    %220 = vmatprep.subr.mxu0 0.0
    %221 = vmatpush1.msra.mxu0 0.0
    %222 = vmatprep.subr.mxu0 0.0
    %223 = vmatpush1.msra.mxu0 0.0
    %224 = vmatprep.subr.mxu0 0.0
    %225 = vmatpush1.msra.mxu0 0.0
    %226 = vmatprep.mubr.f32.mxu0 0.0
    %v227 = vand.u32 %v69, 4294901760
    %228 = vmatmul.mubr.f32.gmra.mrb[0].mxu0 %v227
    %v229 = vpop.f32.mrb[0].mxu0
    %v230 = vadd.f32 %v149, %v229
    %v231 = vpop.f32.mrb[0].mxu0
    %232 = vdwg.mxu0
    %233 = vmatprep.subr.mxu0 0.0
    %v234 = vand.u32 %v58, 4294901760
    %v235 = vsub.f32 %v58, %v234
    %236 = vmatpush1.msra.mxu0 %v235
    %237 = vmatprep.subr.mxu0 0.0
    %v238 = vand.u32 %v73, 4294901760
    %v239 = vsub.f32 %v73, %v238
    %240 = vmatpush1.msra.mxu0 %v239
    %241 = vmatprep.subr.mxu0 0.0
    %242 = vmatpush1.msra.mxu0 0.0
    %243 = vmatprep.subr.mxu0 0.0
    %244 = vmatpush1.msra.mxu0 0.0
    %245 = vmatprep.subr.mxu0 0.0
    %246 = vmatpush1.msra.mxu0 0.0
    %247 = vmatprep.subr.mxu0 0.0
    %248 = vmatpush1.msra.mxu0 0.0
    %249 = vmatprep.subr.mxu0 0.0
    %250 = vmatpush1.msra.mxu0 0.0
    %251 = vmatprep.subr.mxu0 0.0
    %252 = vmatpush1.msra.mxu0 0.0
    %253 = vmatprep.subr.mxu0 0.0
    %254 = vmatpush1.msra.mxu0 0.0
    %255 = vmatprep.subr.mxu0 0.0
    %256 = vmatpush1.msra.mxu0 0.0
    %257 = vmatprep.subr.mxu0 0.0
    %258 = vmatpush1.msra.mxu0 0.0
    %259 = vmatprep.subr.mxu0 0.0
    %260 = vmatpush1.msra.mxu0 0.0
    %261 = vmatprep.subr.mxu0 0.0
    %262 = vmatpush1.msra.mxu0 0.0
    %263 = vmatprep.subr.mxu0 0.0
    %264 = vmatpush1.msra.mxu0 0.0
    %265 = vmatprep.subr.mxu0 0.0
    %266 = vmatpush1.msra.mxu0 0.0
    %267 = vmatprep.subr.mxu0 0.0
    %268 = vmatpush1.msra.mxu0 0.0
    %269 = vmatprep.subr.mxu0 0.0
    %270 = vmatpush1.msra.mxu0 0.0
    %271 = vmatprep.subr.mxu0 0.0
    %272 = vmatpush1.msra.mxu0 0.0
    %273 = vmatprep.subr.mxu0 0.0
    %274 = vmatpush1.msra.mxu0 0.0
    %275 = vmatprep.subr.mxu0 0.0
    %276 = vmatpush1.msra.mxu0 0.0
    %277 = vmatprep.subr.mxu0 0.0
    %278 = vmatpush1.msra.mxu0 0.0
    %279 = vmatprep.subr.mxu0 0.0
    %280 = vmatpush1.msra.mxu0 0.0
    %281 = vmatprep.subr.mxu0 0.0
    %282 = vmatpush1.msra.mxu0 0.0
    %283 = vmatprep.subr.mxu0 0.0
    %284 = vmatpush1.msra.mxu0 0.0
    %285 = vmatprep.subr.mxu0 0.0
    %286 = vmatpush1.msra.mxu0 0.0
    %287 = vmatprep.subr.mxu0 0.0
    %288 = vmatpush1.msra.mxu0 0.0
    %289 = vmatprep.subr.mxu0 0.0
    %290 = vmatpush1.msra.mxu0 0.0
    %291 = vmatprep.subr.mxu0 0.0
    %292 = vmatpush1.msra.mxu0 0.0
    %293 = vmatprep.subr.mxu0 0.0
    %294 = vmatpush1.msra.mxu0 0.0
    %295 = vmatprep.subr.mxu0 0.0
    %296 = vmatpush1.msra.mxu0 0.0
    %297 = vmatprep.subr.mxu0 0.0
    %298 = vmatpush1.msra.mxu0 0.0
    %299 = vmatprep.subr.mxu0 0.0
    %300 = vmatpush1.msra.mxu0 0.0
    %301 = vmatprep.mubr.f32.mxu0 0.0
    %v302 = vand.u32 %v69, 4294901760
    %v303 = vsub.f32 %v69, %v302
    %304 = vmatmul.mubr.f32.gmra.mrb[0].mxu0 %v303
    %v305 = vpop.f32.mrb[0].mxu0
    %v306 = vadd.f32 %v230, %v305
    %v307 = vpop.f32.mrb[0].mxu0
    %308 = vdwg.mxu0
    %309 = vmatprep.subr.mxu0 0.0
    %v310 = vand.u32 %v58, 4294901760
    %311 = vmatpush1.msra.mxu0 %v310
    %312 = vmatprep.subr.mxu0 0.0
    %v313 = vand.u32 %v73, 4294901760
    %314 = vmatpush1.msra.mxu0 %v313
    %315 = vmatprep.subr.mxu0 0.0
    %316 = vmatpush1.msra.mxu0 0.0
    %317 = vmatprep.subr.mxu0 0.0
    %318 = vmatpush1.msra.mxu0 0.0
    %319 = vmatprep.subr.mxu0 0.0
    %320 = vmatpush1.msra.mxu0 0.0
    %321 = vmatprep.subr.mxu0 0.0
    %322 = vmatpush1.msra.mxu0 0.0
    %323 = vmatprep.subr.mxu0 0.0
    %324 = vmatpush1.msra.mxu0 0.0
    %325 = vmatprep.subr.mxu0 0.0
    %326 = vmatpush1.msra.mxu0 0.0
    %327 = vmatprep.subr.mxu0 0.0
    %328 = vmatpush1.msra.mxu0 0.0
    %329 = vmatprep.subr.mxu0 0.0
    %330 = vmatpush1.msra.mxu0 0.0
    %331 = vmatprep.subr.mxu0 0.0
    %332 = vmatpush1.msra.mxu0 0.0
    %333 = vmatprep.subr.mxu0 0.0
    %334 = vmatpush1.msra.mxu0 0.0
    %335 = vmatprep.subr.mxu0 0.0
    %336 = vmatpush1.msra.mxu0 0.0
    %337 = vmatprep.subr.mxu0 0.0
    %338 = vmatpush1.msra.mxu0 0.0
    %339 = vmatprep.subr.mxu0 0.0
    %340 = vmatpush1.msra.mxu0 0.0
    %341 = vmatprep.subr.mxu0 0.0
    %342 = vmatpush1.msra.mxu0 0.0
    %343 = vmatprep.subr.mxu0 0.0
    %344 = vmatpush1.msra.mxu0 0.0
    %345 = vmatprep.subr.mxu0 0.0
    %346 = vmatpush1.msra.mxu0 0.0
    %347 = vmatprep.subr.mxu0 0.0
    %348 = vmatpush1.msra.mxu0 0.0
    %349 = vmatprep.subr.mxu0 0.0
    %350 = vmatpush1.msra.mxu0 0.0
    %351 = vmatprep.subr.mxu0 0.0
    %352 = vmatpush1.msra.mxu0 0.0
    %353 = vmatprep.subr.mxu0 0.0
    %354 = vmatpush1.msra.mxu0 0.0
    %355 = vmatprep.subr.mxu0 0.0
    %356 = vmatpush1.msra.mxu0 0.0
    %357 = vmatprep.subr.mxu0 0.0
    %358 = vmatpush1.msra.mxu0 0.0
    %359 = vmatprep.subr.mxu0 0.0
    %360 = vmatpush1.msra.mxu0 0.0
    %361 = vmatprep.subr.mxu0 0.0
    %362 = vmatpush1.msra.mxu0 0.0
    %363 = vmatprep.subr.mxu0 0.0
    %364 = vmatpush1.msra.mxu0 0.0
    %365 = vmatprep.subr.mxu0 0.0
    %366 = vmatpush1.msra.mxu0 0.0
    %367 = vmatprep.subr.mxu0 0.0
    %368 = vmatpush1.msra.mxu0 0.0
    %369 = vmatprep.subr.mxu0 0.0
    %370 = vmatpush1.msra.mxu0 0.0
    %371 = vmatprep.subr.mxu0 0.0
    %372 = vmatpush1.msra.mxu0 0.0
    %373 = vmatprep.subr.mxu0 0.0
    %374 = vmatpush1.msra.mxu0 0.0
    %375 = vmatprep.mubr.f32.mxu0 0.0
    %v376 = vand.u32 %v69, 4294901760
    %v377 = vsub.f32 %v69, %v376
    %v378 = vand.u32 %v377, 4294901760
    %379 = vmatmul.mubr.f32.gmra.mrb[0].mxu0 %v378
    %v380 = vpop.f32.mrb[0].mxu0
    %v381 = vadd.f32 %v306, %v380
    %v382 = vpop.f32.mrb[0].mxu0
    %383 = vdwg.mxu0
    %384 = vmatprep.subr.mxu0 0.0
    %v385 = vand.u32 %v58, 4294901760
    %v386 = vsub.f32 %v58, %v385
    %v387 = vand.u32 %v386, 4294901760
    %388 = vmatpush1.msra.mxu0 %v387
    %389 = vmatprep.subr.mxu0 0.0
    %v390 = vand.u32 %v73, 4294901760
    %v391 = vsub.f32 %v73, %v390
    %v392 = vand.u32 %v391, 4294901760
    %393 = vmatpush1.msra.mxu0 %v392
    %394 = vmatprep.subr.mxu0 0.0
    %395 = vmatpush1.msra.mxu0 0.0
    %396 = vmatprep.subr.mxu0 0.0
    %397 = vmatpush1.msra.mxu0 0.0
    %398 = vmatprep.subr.mxu0 0.0
    %399 = vmatpush1.msra.mxu0 0.0
    %400 = vmatprep.subr.mxu0 0.0
    %401 = vmatpush1.msra.mxu0 0.0
    %402 = vmatprep.subr.mxu0 0.0
    %403 = vmatpush1.msra.mxu0 0.0
    %404 = vmatprep.subr.mxu0 0.0
    %405 = vmatpush1.msra.mxu0 0.0
    %406 = vmatprep.subr.mxu0 0.0
    %407 = vmatpush1.msra.mxu0 0.0
    %408 = vmatprep.subr.mxu0 0.0
    %409 = vmatpush1.msra.mxu0 0.0
    %410 = vmatprep.subr.mxu0 0.0
    %411 = vmatpush1.msra.mxu0 0.0
    %412 = vmatprep.subr.mxu0 0.0
    %413 = vmatpush1.msra.mxu0 0.0
    %414 = vmatprep.subr.mxu0 0.0
    %415 = vmatpush1.msra.mxu0 0.0
    %416 = vmatprep.subr.mxu0 0.0
    %417 = vmatpush1.msra.mxu0 0.0
    %418 = vmatprep.subr.mxu0 0.0
    %419 = vmatpush1.msra.mxu0 0.0
    %420 = vmatprep.subr.mxu0 0.0
    %421 = vmatpush1.msra.mxu0 0.0
    %422 = vmatprep.subr.mxu0 0.0
    %423 = vmatpush1.msra.mxu0 0.0
    %424 = vmatprep.subr.mxu0 0.0
    %425 = vmatpush1.msra.mxu0 0.0
    %426 = vmatprep.subr.mxu0 0.0
    %427 = vmatpush1.msra.mxu0 0.0
    %428 = vmatprep.subr.mxu0 0.0
    %429 = vmatpush1.msra.mxu0 0.0
    %430 = vmatprep.subr.mxu0 0.0
    %431 = vmatpush1.msra.mxu0 0.0
    %432 = vmatprep.subr.mxu0 0.0
    %433 = vmatpush1.msra.mxu0 0.0
    %434 = vmatprep.subr.mxu0 0.0
    %435 = vmatpush1.msra.mxu0 0.0
    %436 = vmatprep.subr.mxu0 0.0
    %437 = vmatpush1.msra.mxu0 0.0
    %438 = vmatprep.subr.mxu0 0.0
    %439 = vmatpush1.msra.mxu0 0.0
    %440 = vmatprep.subr.mxu0 0.0
    %441 = vmatpush1.msra.mxu0 0.0
    %442 = vmatprep.subr.mxu0 0.0
    %443 = vmatpush1.msra.mxu0 0.0
    %444 = vmatprep.subr.mxu0 0.0
    %445 = vmatpush1.msra.mxu0 0.0
    %446 = vmatprep.subr.mxu0 0.0
    %447 = vmatpush1.msra.mxu0 0.0
    %448 = vmatprep.subr.mxu0 0.0
    %449 = vmatpush1.msra.mxu0 0.0
    %450 = vmatprep.subr.mxu0 0.0
    %451 = vmatpush1.msra.mxu0 0.0
    %452 = vmatprep.subr.mxu0 0.0
    %453 = vmatpush1.msra.mxu0 0.0
    %454 = vmatprep.mubr.f32.mxu0 0.0
    %v455 = vand.u32 %v69, 4294901760
    %456 = vmatmul.mubr.f32.gmra.mrb[0].mxu0 %v455
    %v457 = vpop.f32.mrb[0].mxu0
    %v458 = vadd.f32 %v381, %v457
    %v459 = vpop.f32.mrb[0].mxu0
    %460 = vdwg.mxu0
    %461 = vmatprep.subr.mxu0 0.0
    %v462 = vand.u32 %v58, 4294901760
    %463 = vmatpush1.msra.mxu0 %v462
    %464 = vmatprep.subr.mxu0 0.0
    %v465 = vand.u32 %v73, 4294901760
    %466 = vmatpush1.msra.mxu0 %v465
    %467 = vmatprep.subr.mxu0 0.0
    %468 = vmatpush1.msra.mxu0 0.0
    %469 = vmatprep.subr.mxu0 0.0
    %470 = vmatpush1.msra.mxu0 0.0
    %471 = vmatprep.subr.mxu0 0.0
    %472 = vmatpush1.msra.mxu0 0.0
    %473 = vmatprep.subr.mxu0 0.0
    %474 = vmatpush1.msra.mxu0 0.0
    %475 = vmatprep.subr.mxu0 0.0
    %476 = vmatpush1.msra.mxu0 0.0
    %477 = vmatprep.subr.mxu0 0.0
    %478 = vmatpush1.msra.mxu0 0.0
    %479 = vmatprep.subr.mxu0 0.0
    %480 = vmatpush1.msra.mxu0 0.0
    %481 = vmatprep.subr.mxu0 0.0
    %482 = vmatpush1.msra.mxu0 0.0
    %483 = vmatprep.subr.mxu0 0.0
    %484 = vmatpush1.msra.mxu0 0.0
    %485 = vmatprep.subr.mxu0 0.0
    %486 = vmatpush1.msra.mxu0 0.0
    %487 = vmatprep.subr.mxu0 0.0
    %488 = vmatpush1.msra.mxu0 0.0
    %489 = vmatprep.subr.mxu0 0.0
    %490 = vmatpush1.msra.mxu0 0.0
    %491 = vmatprep.subr.mxu0 0.0
    %492 = vmatpush1.msra.mxu0 0.0
    %493 = vmatprep.subr.mxu0 0.0
    %494 = vmatpush1.msra.mxu0 0.0
    %495 = vmatprep.subr.mxu0 0.0
    %496 = vmatpush1.msra.mxu0 0.0
    %497 = vmatprep.subr.mxu0 0.0
    %498 = vmatpush1.msra.mxu0 0.0
    %499 = vmatprep.subr.mxu0 0.0
    %500 = vmatpush1.msra.mxu0 0.0
    %501 = vmatprep.subr.mxu0 0.0
    %502 = vmatpush1.msra.mxu0 0.0
    %503 = vmatprep.subr.mxu0 0.0
    %504 = vmatpush1.msra.mxu0 0.0
    %505 = vmatprep.subr.mxu0 0.0
    %506 = vmatpush1.msra.mxu0 0.0
    %507 = vmatprep.subr.mxu0 0.0
    %508 = vmatpush1.msra.mxu0 0.0
    %509 = vmatprep.subr.mxu0 0.0
    %510 = vmatpush1.msra.mxu0 0.0
    %511 = vmatprep.subr.mxu0 0.0
    %512 = vmatpush1.msra.mxu0 0.0
    %513 = vmatprep.subr.mxu0 0.0
    %514 = vmatpush1.msra.mxu0 0.0
    %515 = vmatprep.subr.mxu0 0.0
    %516 = vmatpush1.msra.mxu0 0.0
    %517 = vmatprep.subr.mxu0 0.0
    %518 = vmatpush1.msra.mxu0 0.0
    %519 = vmatprep.subr.mxu0 0.0
    %520 = vmatpush1.msra.mxu0 0.0
    %521 = vmatprep.subr.mxu0 0.0
    %522 = vmatpush1.msra.mxu0 0.0
    %523 = vmatprep.subr.mxu0 0.0
    %524 = vmatpush1.msra.mxu0 0.0
    %525 = vmatprep.subr.mxu0 0.0
    %526 = vmatpush1.msra.mxu0 0.0
    %527 = vmatprep.mubr.f32.mxu0 0.0
    %v528 = vand.u32 %v69, 4294901760
    %529 = vmatmul.mubr.f32.gmra.mrb[0].mxu0 %v528
    %v530 = vpop.f32.mrb[0].mxu0
    %v531 = vadd.f32 %v458, %v530
    %v532 = vpop.f32.mrb[0].mxu0
    %533 = vdwg.mxu0
    %v534 = vmax.f32 %v531, 0.0
    %v535 = vld [vmem:[#allocation7] sm:$0xff]
    %v536 = vld [vmem:[#allocation7 + $0x8] sm:$0xff]
    %v537 = vld [vmem:[#allocation7 + $0x10] sm:$0xff]
    %v538 = vld [vmem:[#allocation7 + $0x18] sm:$0xff]
    %v539 = vld [vmem:[#allocation7 + $0x20] sm:$0xff]
    %v540 = vld [vmem:[#allocation7 + $0x28] sm:$0xff]
    %v541 = vld [vmem:[#allocation7 + $0x30] sm:$0xff]
    %v542 = vld [vmem:[#allocation7 + $0x38] sm:$0xff]
    %v543 = vld [vmem:[#allocation7 + $0x40] sm:$0xff]
    %v544 = vld [vmem:[#allocation7 + $0x48] sm:$0xff]
    %v545 = vld [vmem:[#allocation7 + $0x50] sm:$0xff]
    %v546 = vld [vmem:[#allocation7 + $0x58] sm:$0xff]
    %v547 = vld [vmem:[#allocation7 + $0x60] sm:$0xff]
    %v548 = vld [vmem:[#allocation7 + $0x68] sm:$0xff]
    %v549 = vld [vmem:[#allocation7 + $0x70] sm:$0xff]
    %v550 = vld [vmem:[#allocation7 + $0x78] sm:$0xff]
    %s551 = scalar_lea.vmem %s3, 1
    %v552 = vld [vmem:[%s551] sm:$0x1]
    %v554 = vlaneseq
    %v555 = vshrl.u32 %v554, 7
    %v556 = vsub.s32 0, %v555
    %v557 = vrot.slane %v552, %v556
    %559 = vmatprep.subr.mxu0 0.0
    %v560 = vand.u32 %v535, 4294901760
    %561 = vmatpush1.msra.mxu0 %v560
    %562 = vmatprep.subr.mxu0 0.0
    %v563 = vand.u32 %v536, 4294901760
    %564 = vmatpush1.msra.mxu0 %v563
    %565 = vmatprep.subr.mxu0 0.0
    %v566 = vand.u32 %v537, 4294901760
    %567 = vmatpush1.msra.mxu0 %v566
    %568 = vmatprep.subr.mxu0 0.0
    %v569 = vand.u32 %v538, 4294901760
    %570 = vmatpush1.msra.mxu0 %v569
    %571 = vmatprep.subr.mxu0 0.0
    %v572 = vand.u32 %v539, 4294901760
    %573 = vmatpush1.msra.mxu0 %v572
    %574 = vmatprep.subr.mxu0 0.0
    %v575 = vand.u32 %v540, 4294901760
    %576 = vmatpush1.msra.mxu0 %v575
    %577 = vmatprep.subr.mxu0 0.0
    %v578 = vand.u32 %v541, 4294901760
    %579 = vmatpush1.msra.mxu0 %v578
    %580 = vmatprep.subr.mxu0 0.0
    %v581 = vand.u32 %v542, 4294901760
    %582 = vmatpush1.msra.mxu0 %v581
    %583 = vmatprep.subr.mxu0 0.0
    %v584 = vand.u32 %v543, 4294901760
    %585 = vmatpush1.msra.mxu0 %v584
    %586 = vmatprep.subr.mxu0 0.0
    %v587 = vand.u32 %v544, 4294901760
    %588 = vmatpush1.msra.mxu0 %v587
    %589 = vmatprep.subr.mxu0 0.0
    %v590 = vand.u32 %v545, 4294901760
    %591 = vmatpush1.msra.mxu0 %v590
    %592 = vmatprep.subr.mxu0 0.0
    %v593 = vand.u32 %v546, 4294901760
    %594 = vmatpush1.msra.mxu0 %v593
    %595 = vmatprep.subr.mxu0 0.0
    %v596 = vand.u32 %v547, 4294901760
    %597 = vmatpush1.msra.mxu0 %v596
    %598 = vmatprep.subr.mxu0 0.0
    %v599 = vand.u32 %v548, 4294901760
    %600 = vmatpush1.msra.mxu0 %v599
    %601 = vmatprep.subr.mxu0 0.0
    %v602 = vand.u32 %v549, 4294901760
    %603 = vmatpush1.msra.mxu0 %v602
    %604 = vmatprep.subr.mxu0 0.0
    %v605 = vand.u32 %v550, 4294901760
    %606 = vmatpush1.msra.mxu0 %v605
    %607 = vmatprep.subr.mxu0 0.0
    %608 = vmatpush1.msra.mxu0 0.0
    %609 = vmatprep.subr.mxu0 0.0
    %610 = vmatpush1.msra.mxu0 0.0
    %611 = vmatprep.subr.mxu0 0.0
    %612 = vmatpush1.msra.mxu0 0.0
    %613 = vmatprep.subr.mxu0 0.0
    %614 = vmatpush1.msra.mxu0 0.0
    %615 = vmatprep.subr.mxu0 0.0
    %616 = vmatpush1.msra.mxu0 0.0
    %617 = vmatprep.subr.mxu0 0.0
    %618 = vmatpush1.msra.mxu0 0.0
    %619 = vmatprep.subr.mxu0 0.0
    %620 = vmatpush1.msra.mxu0 0.0
    %621 = vmatprep.subr.mxu0 0.0
    %622 = vmatpush1.msra.mxu0 0.0
    %623 = vmatprep.subr.mxu0 0.0
    %624 = vmatpush1.msra.mxu0 0.0
    %625 = vmatprep.subr.mxu0 0.0
    %626 = vmatpush1.msra.mxu0 0.0
    %627 = vmatprep.subr.mxu0 0.0
    %628 = vmatpush1.msra.mxu0 0.0
    %629 = vmatprep.subr.mxu0 0.0
    %630 = vmatpush1.msra.mxu0 0.0
    %631 = vmatprep.subr.mxu0 0.0
    %632 = vmatpush1.msra.mxu0 0.0
    %633 = vmatprep.subr.mxu0 0.0
    %634 = vmatpush1.msra.mxu0 0.0
    %635 = vmatprep.subr.mxu0 0.0
    %636 = vmatpush1.msra.mxu0 0.0
    %637 = vmatprep.subr.mxu0 0.0
    %638 = vmatpush1.msra.mxu0 0.0
    %639 = vmatprep.mubr.f32.mxu0 0.0
    %v640 = vand.u32 %v534, 4294901760
    %v641 = vsub.f32 %v534, %v640
    %v642 = vand.u32 %v641, 4294901760
    %v643 = vsub.f32 %v641, %v642
    %v644 = vand.u32 %v643, 4294901760
    %645 = vmatmul.mubr.f32.gmra.mrb[0].mxu0 %v644
    %v646 = vpop.f32.mrb[0].mxu0
    %v647 = vadd.f32 %v557, %v646
    %v648 = vpop.f32.mrb[0].mxu0
    %649 = vdwg.mxu0
    %650 = vmatprep.subr.mxu0 0.0
    %v651 = vand.u32 %v535, 4294901760
    %v652 = vsub.f32 %v535, %v651
    %v653 = vand.u32 %v652, 4294901760
    %v654 = vsub.f32 %v652, %v653
    %v655 = vand.u32 %v654, 4294901760
    %656 = vmatpush1.msra.mxu0 %v655
    %657 = vmatprep.subr.mxu0 0.0
    %v658 = vand.u32 %v536, 4294901760
    %v659 = vsub.f32 %v536, %v658
    %v660 = vand.u32 %v659, 4294901760
    %v661 = vsub.f32 %v659, %v660
    %v662 = vand.u32 %v661, 4294901760
    %663 = vmatpush1.msra.mxu0 %v662
    %664 = vmatprep.subr.mxu0 0.0
    %v665 = vand.u32 %v537, 4294901760
    %v666 = vsub.f32 %v537, %v665
    %v667 = vand.u32 %v666, 4294901760
    %v668 = vsub.f32 %v666, %v667
    %v669 = vand.u32 %v668, 4294901760
    %670 = vmatpush1.msra.mxu0 %v669
    %671 = vmatprep.subr.mxu0 0.0
    %v672 = vand.u32 %v538, 4294901760
    %v673 = vsub.f32 %v538, %v672
    %v674 = vand.u32 %v673, 4294901760
    %v675 = vsub.f32 %v673, %v674
    %v676 = vand.u32 %v675, 4294901760
    %677 = vmatpush1.msra.mxu0 %v676
    %678 = vmatprep.subr.mxu0 0.0
    %v679 = vand.u32 %v539, 4294901760
    %v680 = vsub.f32 %v539, %v679
    %v681 = vand.u32 %v680, 4294901760
    %v682 = vsub.f32 %v680, %v681
    %v683 = vand.u32 %v682, 4294901760
    %684 = vmatpush1.msra.mxu0 %v683
    %685 = vmatprep.subr.mxu0 0.0
    %v686 = vand.u32 %v540, 4294901760
    %v687 = vsub.f32 %v540, %v686
    %v688 = vand.u32 %v687, 4294901760
    %v689 = vsub.f32 %v687, %v688
    %v690 = vand.u32 %v689, 4294901760
    %691 = vmatpush1.msra.mxu0 %v690
    %692 = vmatprep.subr.mxu0 0.0
    %v693 = vand.u32 %v541, 4294901760
    %v694 = vsub.f32 %v541, %v693
    %v695 = vand.u32 %v694, 4294901760
    %v696 = vsub.f32 %v694, %v695
    %v697 = vand.u32 %v696, 4294901760
    %698 = vmatpush1.msra.mxu0 %v697
    %699 = vmatprep.subr.mxu0 0.0
    %v700 = vand.u32 %v542, 4294901760
    %v701 = vsub.f32 %v542, %v700
    %v702 = vand.u32 %v701, 4294901760
    %v703 = vsub.f32 %v701, %v702
    %v704 = vand.u32 %v703, 4294901760
    %705 = vmatpush1.msra.mxu0 %v704
    %706 = vmatprep.subr.mxu0 0.0
    %v707 = vand.u32 %v543, 4294901760
    %v708 = vsub.f32 %v543, %v707
    %v709 = vand.u32 %v708, 4294901760
    %v710 = vsub.f32 %v708, %v709
    %v711 = vand.u32 %v710, 4294901760
    %712 = vmatpush1.msra.mxu0 %v711
    %713 = vmatprep.subr.mxu0 0.0
    %v714 = vand.u32 %v544, 4294901760
    %v715 = vsub.f32 %v544, %v714
    %v716 = vand.u32 %v715, 4294901760
    %v717 = vsub.f32 %v715, %v716
    %v718 = vand.u32 %v717, 4294901760
    %719 = vmatpush1.msra.mxu0 %v718
    %720 = vmatprep.subr.mxu0 0.0
    %v721 = vand.u32 %v545, 4294901760
    %v722 = vsub.f32 %v545, %v721
    %v723 = vand.u32 %v722, 4294901760
    %v724 = vsub.f32 %v722, %v723
    %v725 = vand.u32 %v724, 4294901760
    %726 = vmatpush1.msra.mxu0 %v725
    %727 = vmatprep.subr.mxu0 0.0
    %v728 = vand.u32 %v546, 4294901760
    %v729 = vsub.f32 %v546, %v728
    %v730 = vand.u32 %v729, 4294901760
    %v731 = vsub.f32 %v729, %v730
    %v732 = vand.u32 %v731, 4294901760
    %733 = vmatpush1.msra.mxu0 %v732
    %734 = vmatprep.subr.mxu0 0.0
    %v735 = vand.u32 %v547, 4294901760
    %v736 = vsub.f32 %v547, %v735
    %v737 = vand.u32 %v736, 4294901760
    %v738 = vsub.f32 %v736, %v737
    %v739 = vand.u32 %v738, 4294901760
    %740 = vmatpush1.msra.mxu0 %v739
    %741 = vmatprep.subr.mxu0 0.0
    %v742 = vand.u32 %v548, 4294901760
    %v743 = vsub.f32 %v548, %v742
    %v744 = vand.u32 %v743, 4294901760
    %v745 = vsub.f32 %v743, %v744
    %v746 = vand.u32 %v745, 4294901760
    %747 = vmatpush1.msra.mxu0 %v746
    %748 = vmatprep.subr.mxu0 0.0
    %v749 = vand.u32 %v549, 4294901760
    %v750 = vsub.f32 %v549, %v749
    %v751 = vand.u32 %v750, 4294901760
    %v752 = vsub.f32 %v750, %v751
    %v753 = vand.u32 %v752, 4294901760
    %754 = vmatpush1.msra.mxu0 %v753
    %755 = vmatprep.subr.mxu0 0.0
    %v756 = vand.u32 %v550, 4294901760
    %v757 = vsub.f32 %v550, %v756
    %v758 = vand.u32 %v757, 4294901760
    %v759 = vsub.f32 %v757, %v758
    %v760 = vand.u32 %v759, 4294901760
    %761 = vmatpush1.msra.mxu0 %v760
    %762 = vmatprep.subr.mxu0 0.0
    %763 = vmatpush1.msra.mxu0 0.0
    %764 = vmatprep.subr.mxu0 0.0
    %765 = vmatpush1.msra.mxu0 0.0
    %766 = vmatprep.subr.mxu0 0.0
    %767 = vmatpush1.msra.mxu0 0.0
    %768 = vmatprep.subr.mxu0 0.0
    %769 = vmatpush1.msra.mxu0 0.0
    %770 = vmatprep.subr.mxu0 0.0
    %771 = vmatpush1.msra.mxu0 0.0
    %772 = vmatprep.subr.mxu0 0.0
    %773 = vmatpush1.msra.mxu0 0.0
    %774 = vmatprep.subr.mxu0 0.0
    %775 = vmatpush1.msra.mxu0 0.0
    %776 = vmatprep.subr.mxu0 0.0
    %777 = vmatpush1.msra.mxu0 0.0
    %778 = vmatprep.subr.mxu0 0.0
    %779 = vmatpush1.msra.mxu0 0.0
    %780 = vmatprep.subr.mxu0 0.0
    %781 = vmatpush1.msra.mxu0 0.0
    %782 = vmatprep.subr.mxu0 0.0
    %783 = vmatpush1.msra.mxu0 0.0
    %784 = vmatprep.subr.mxu0 0.0
    %785 = vmatpush1.msra.mxu0 0.0
    %786 = vmatprep.subr.mxu0 0.0
    %787 = vmatpush1.msra.mxu0 0.0
    %788 = vmatprep.subr.mxu0 0.0
    %789 = vmatpush1.msra.mxu0 0.0
    %790 = vmatprep.subr.mxu0 0.0
    %791 = vmatpush1.msra.mxu0 0.0
    %792 = vmatprep.subr.mxu0 0.0
    %793 = vmatpush1.msra.mxu0 0.0
    %794 = vmatprep.mubr.f32.mxu0 0.0
    %v795 = vand.u32 %v534, 4294901760
    %796 = vmatmul.mubr.f32.gmra.mrb[0].mxu0 %v795
    %v797 = vpop.f32.mrb[0].mxu0
    %v798 = vadd.f32 %v647, %v797
    %v799 = vpop.f32.mrb[0].mxu0
    %800 = vdwg.mxu0
    %801 = vmatprep.subr.mxu0 0.0
    %v802 = vand.u32 %v535, 4294901760
    %v803 = vsub.f32 %v535, %v802
    %804 = vmatpush1.msra.mxu0 %v803
    %805 = vmatprep.subr.mxu0 0.0
    %v806 = vand.u32 %v536, 4294901760
    %v807 = vsub.f32 %v536, %v806
    %808 = vmatpush1.msra.mxu0 %v807
    %809 = vmatprep.subr.mxu0 0.0
    %v810 = vand.u32 %v537, 4294901760
    %v811 = vsub.f32 %v537, %v810
    %812 = vmatpush1.msra.mxu0 %v811
    %813 = vmatprep.subr.mxu0 0.0
    %v814 = vand.u32 %v538, 4294901760
    %v815 = vsub.f32 %v538, %v814
    %816 = vmatpush1.msra.mxu0 %v815
    %817 = vmatprep.subr.mxu0 0.0
    %v818 = vand.u32 %v539, 4294901760
    %v819 = vsub.f32 %v539, %v818
    %820 = vmatpush1.msra.mxu0 %v819
    %821 = vmatprep.subr.mxu0 0.0
    %v822 = vand.u32 %v540, 4294901760
    %v823 = vsub.f32 %v540, %v822
    %824 = vmatpush1.msra.mxu0 %v823
    %825 = vmatprep.subr.mxu0 0.0
    %v826 = vand.u32 %v541, 4294901760
    %v827 = vsub.f32 %v541, %v826
    %828 = vmatpush1.msra.mxu0 %v827
    %829 = vmatprep.subr.mxu0 0.0
    %v830 = vand.u32 %v542, 4294901760
    %v831 = vsub.f32 %v542, %v830
    %832 = vmatpush1.msra.mxu0 %v831
    %833 = vmatprep.subr.mxu0 0.0
    %v834 = vand.u32 %v543, 4294901760
    %v835 = vsub.f32 %v543, %v834
    %836 = vmatpush1.msra.mxu0 %v835
    %837 = vmatprep.subr.mxu0 0.0
    %v838 = vand.u32 %v544, 4294901760
    %v839 = vsub.f32 %v544, %v838
    %840 = vmatpush1.msra.mxu0 %v839
    %841 = vmatprep.subr.mxu0 0.0
    %v842 = vand.u32 %v545, 4294901760
    %v843 = vsub.f32 %v545, %v842
    %844 = vmatpush1.msra.mxu0 %v843
    %845 = vmatprep.subr.mxu0 0.0
    %v846 = vand.u32 %v546, 4294901760
    %v847 = vsub.f32 %v546, %v846
    %848 = vmatpush1.msra.mxu0 %v847
    %849 = vmatprep.subr.mxu0 0.0
    %v850 = vand.u32 %v547, 4294901760
    %v851 = vsub.f32 %v547, %v850
    %852 = vmatpush1.msra.mxu0 %v851
    %853 = vmatprep.subr.mxu0 0.0
    %v854 = vand.u32 %v548, 4294901760
    %v855 = vsub.f32 %v548, %v854
    %856 = vmatpush1.msra.mxu0 %v855
    %857 = vmatprep.subr.mxu0 0.0
    %v858 = vand.u32 %v549, 4294901760
    %v859 = vsub.f32 %v549, %v858
    %860 = vmatpush1.msra.mxu0 %v859
    %861 = vmatprep.subr.mxu0 0.0
    %v862 = vand.u32 %v550, 4294901760
    %v863 = vsub.f32 %v550, %v862
    %864 = vmatpush1.msra.mxu0 %v863
    %865 = vmatprep.subr.mxu0 0.0
    %866 = vmatpush1.msra.mxu0 0.0
    %867 = vmatprep.subr.mxu0 0.0
    %868 = vmatpush1.msra.mxu0 0.0
    %869 = vmatprep.subr.mxu0 0.0
    %870 = vmatpush1.msra.mxu0 0.0
    %871 = vmatprep.subr.mxu0 0.0
    %872 = vmatpush1.msra.mxu0 0.0
    %873 = vmatprep.subr.mxu0 0.0
    %874 = vmatpush1.msra.mxu0 0.0
    %875 = vmatprep.subr.mxu0 0.0
    %876 = vmatpush1.msra.mxu0 0.0
    %877 = vmatprep.subr.mxu0 0.0
    %878 = vmatpush1.msra.mxu0 0.0
    %879 = vmatprep.subr.mxu0 0.0
    %880 = vmatpush1.msra.mxu0 0.0
    %881 = vmatprep.subr.mxu0 0.0
    %882 = vmatpush1.msra.mxu0 0.0
    %883 = vmatprep.subr.mxu0 0.0
    %884 = vmatpush1.msra.mxu0 0.0
    %885 = vmatprep.subr.mxu0 0.0
    %886 = vmatpush1.msra.mxu0 0.0
    %887 = vmatprep.subr.mxu0 0.0
    %888 = vmatpush1.msra.mxu0 0.0
    %889 = vmatprep.subr.mxu0 0.0
    %890 = vmatpush1.msra.mxu0 0.0
    %891 = vmatprep.subr.mxu0 0.0
    %892 = vmatpush1.msra.mxu0 0.0
    %893 = vmatprep.subr.mxu0 0.0
    %894 = vmatpush1.msra.mxu0 0.0
    %895 = vmatprep.subr.mxu0 0.0
    %896 = vmatpush1.msra.mxu0 0.0
    %897 = vmatprep.mubr.f32.mxu0 0.0
    %v898 = vand.u32 %v534, 4294901760
    %v899 = vsub.f32 %v534, %v898
    %900 = vmatmul.mubr.f32.gmra.mrb[0].mxu0 %v899
    %v901 = vpop.f32.mrb[0].mxu0
    %v902 = vadd.f32 %v798, %v901
    %v903 = vpop.f32.mrb[0].mxu0
    %904 = vdwg.mxu0
    %905 = vmatprep.subr.mxu0 0.0
    %v906 = vand.u32 %v535, 4294901760
    %907 = vmatpush1.msra.mxu0 %v906
    %908 = vmatprep.subr.mxu0 0.0
    %v909 = vand.u32 %v536, 4294901760
    %910 = vmatpush1.msra.mxu0 %v909
    %911 = vmatprep.subr.mxu0 0.0
    %v912 = vand.u32 %v537, 4294901760
    %913 = vmatpush1.msra.mxu0 %v912
    %914 = vmatprep.subr.mxu0 0.0
    %v915 = vand.u32 %v538, 4294901760
    %916 = vmatpush1.msra.mxu0 %v915
    %917 = vmatprep.subr.mxu0 0.0
    %v918 = vand.u32 %v539, 4294901760
    %919 = vmatpush1.msra.mxu0 %v918
    %920 = vmatprep.subr.mxu0 0.0
    %v921 = vand.u32 %v540, 4294901760
    %922 = vmatpush1.msra.mxu0 %v921
    %923 = vmatprep.subr.mxu0 0.0
    %v924 = vand.u32 %v541, 4294901760
    %925 = vmatpush1.msra.mxu0 %v924
    %926 = vmatprep.subr.mxu0 0.0
    %v927 = vand.u32 %v542, 4294901760
    %928 = vmatpush1.msra.mxu0 %v927
    %929 = vmatprep.subr.mxu0 0.0
    %v930 = vand.u32 %v543, 4294901760
    %931 = vmatpush1.msra.mxu0 %v930
    %932 = vmatprep.subr.mxu0 0.0
    %v933 = vand.u32 %v544, 4294901760
    %934 = vmatpush1.msra.mxu0 %v933
    %935 = vmatprep.subr.mxu0 0.0
    %v936 = vand.u32 %v545, 4294901760
    %937 = vmatpush1.msra.mxu0 %v936
    %938 = vmatprep.subr.mxu0 0.0
    %v939 = vand.u32 %v546, 4294901760
    %940 = vmatpush1.msra.mxu0 %v939
    %941 = vmatprep.subr.mxu0 0.0
    %v942 = vand.u32 %v547, 4294901760
    %943 = vmatpush1.msra.mxu0 %v942
    %944 = vmatprep.subr.mxu0 0.0
    %v945 = vand.u32 %v548, 4294901760
    %946 = vmatpush1.msra.mxu0 %v945
    %947 = vmatprep.subr.mxu0 0.0
    %v948 = vand.u32 %v549, 4294901760
    %949 = vmatpush1.msra.mxu0 %v948
    %950 = vmatprep.subr.mxu0 0.0
    %v951 = vand.u32 %v550, 4294901760
    %952 = vmatpush1.msra.mxu0 %v951
    %953 = vmatprep.subr.mxu0 0.0
    %954 = vmatpush1.msra.mxu0 0.0
    %955 = vmatprep.subr.mxu0 0.0
    %956 = vmatpush1.msra.mxu0 0.0
    %957 = vmatprep.subr.mxu0 0.0
    %958 = vmatpush1.msra.mxu0 0.0
    %959 = vmatprep.subr.mxu0 0.0
    %960 = vmatpush1.msra.mxu0 0.0
    %961 = vmatprep.subr.mxu0 0.0
    %962 = vmatpush1.msra.mxu0 0.0
    %963 = vmatprep.subr.mxu0 0.0
    %964 = vmatpush1.msra.mxu0 0.0
    %965 = vmatprep.subr.mxu0 0.0
    %966 = vmatpush1.msra.mxu0 0.0
    %967 = vmatprep.subr.mxu0 0.0
    %968 = vmatpush1.msra.mxu0 0.0
    %969 = vmatprep.subr.mxu0 0.0
    %970 = vmatpush1.msra.mxu0 0.0
    %971 = vmatprep.subr.mxu0 0.0
    %972 = vmatpush1.msra.mxu0 0.0
    %973 = vmatprep.subr.mxu0 0.0
    %974 = vmatpush1.msra.mxu0 0.0
    %975 = vmatprep.subr.mxu0 0.0
    %976 = vmatpush1.msra.mxu0 0.0
    %977 = vmatprep.subr.mxu0 0.0
    %978 = vmatpush1.msra.mxu0 0.0
    %979 = vmatprep.subr.mxu0 0.0
    %980 = vmatpush1.msra.mxu0 0.0
    %981 = vmatprep.subr.mxu0 0.0
    %982 = vmatpush1.msra.mxu0 0.0
    %983 = vmatprep.subr.mxu0 0.0
    %984 = vmatpush1.msra.mxu0 0.0
    %985 = vmatprep.mubr.f32.mxu0 0.0
    %v986 = vand.u32 %v534, 4294901760
    %v987 = vsub.f32 %v534, %v986
    %v988 = vand.u32 %v987, 4294901760
    %989 = vmatmul.mubr.f32.gmra.mrb[0].mxu0 %v988
    %v990 = vpop.f32.mrb[0].mxu0
    %v991 = vadd.f32 %v902, %v990
    %v992 = vpop.f32.mrb[0].mxu0
    %993 = vdwg.mxu0
    %994 = vmatprep.subr.mxu0 0.0
    %v995 = vand.u32 %v535, 4294901760
    %v996 = vsub.f32 %v535, %v995
    %v997 = vand.u32 %v996, 4294901760
    %998 = vmatpush1.msra.mxu0 %v997
    %999 = vmatprep.subr.mxu0 0.0
    %v1000 = vand.u32 %v536, 4294901760
    %v1001 = vsub.f32 %v536, %v1000
    %v1002 = vand.u32 %v1001, 4294901760
    %1003 = vmatpush1.msra.mxu0 %v1002
    %1004 = vmatprep.subr.mxu0 0.0
    %v1005 = vand.u32 %v537, 4294901760
    %v1006 = vsub.f32 %v537, %v1005
    %v1007 = vand.u32 %v1006, 4294901760
    %1008 = vmatpush1.msra.mxu0 %v1007
    %1009 = vmatprep.subr.mxu0 0.0
    %v1010 = vand.u32 %v538, 4294901760
    %v1011 = vsub.f32 %v538, %v1010
    %v1012 = vand.u32 %v1011, 4294901760
    %1013 = vmatpush1.msra.mxu0 %v1012
    %1014 = vmatprep.subr.mxu0 0.0
    %v1015 = vand.u32 %v539, 4294901760
    %v1016 = vsub.f32 %v539, %v1015
    %v1017 = vand.u32 %v1016, 4294901760
    %1018 = vmatpush1.msra.mxu0 %v1017
    %1019 = vmatprep.subr.mxu0 0.0
    %v1020 = vand.u32 %v540, 4294901760
    %v1021 = vsub.f32 %v540, %v1020
    %v1022 = vand.u32 %v1021, 4294901760
    %1023 = vmatpush1.msra.mxu0 %v1022
    %1024 = vmatprep.subr.mxu0 0.0
    %v1025 = vand.u32 %v541, 4294901760
    %v1026 = vsub.f32 %v541, %v1025
    %v1027 = vand.u32 %v1026, 4294901760
    %1028 = vmatpush1.msra.mxu0 %v1027
    %1029 = vmatprep.subr.mxu0 0.0
    %v1030 = vand.u32 %v542, 4294901760
    %v1031 = vsub.f32 %v542, %v1030
    %v1032 = vand.u32 %v1031, 4294901760
    %1033 = vmatpush1.msra.mxu0 %v1032
    %1034 = vmatprep.subr.mxu0 0.0
    %v1035 = vand.u32 %v543, 4294901760
    %v1036 = vsub.f32 %v543, %v1035
    %v1037 = vand.u32 %v1036, 4294901760
    %1038 = vmatpush1.msra.mxu0 %v1037
    %1039 = vmatprep.subr.mxu0 0.0
    %v1040 = vand.u32 %v544, 4294901760
    %v1041 = vsub.f32 %v544, %v1040
    %v1042 = vand.u32 %v1041, 4294901760
    %1043 = vmatpush1.msra.mxu0 %v1042
    %1044 = vmatprep.subr.mxu0 0.0
    %v1045 = vand.u32 %v545, 4294901760
    %v1046 = vsub.f32 %v545, %v1045
    %v1047 = vand.u32 %v1046, 4294901760
    %1048 = vmatpush1.msra.mxu0 %v1047
    %1049 = vmatprep.subr.mxu0 0.0
    %v1050 = vand.u32 %v546, 4294901760
    %v1051 = vsub.f32 %v546, %v1050
    %v1052 = vand.u32 %v1051, 4294901760
    %1053 = vmatpush1.msra.mxu0 %v1052
    %1054 = vmatprep.subr.mxu0 0.0
    %v1055 = vand.u32 %v547, 4294901760
    %v1056 = vsub.f32 %v547, %v1055
    %v1057 = vand.u32 %v1056, 4294901760
    %1058 = vmatpush1.msra.mxu0 %v1057
    %1059 = vmatprep.subr.mxu0 0.0
    %v1060 = vand.u32 %v548, 4294901760
    %v1061 = vsub.f32 %v548, %v1060
    %v1062 = vand.u32 %v1061, 4294901760
    %1063 = vmatpush1.msra.mxu0 %v1062
    %1064 = vmatprep.subr.mxu0 0.0
    %v1065 = vand.u32 %v549, 4294901760
    %v1066 = vsub.f32 %v549, %v1065
    %v1067 = vand.u32 %v1066, 4294901760
    %1068 = vmatpush1.msra.mxu0 %v1067
    %1069 = vmatprep.subr.mxu0 0.0
    %v1070 = vand.u32 %v550, 4294901760
    %v1071 = vsub.f32 %v550, %v1070
    %v1072 = vand.u32 %v1071, 4294901760
    %1073 = vmatpush1.msra.mxu0 %v1072
    %1074 = vmatprep.subr.mxu0 0.0
    %1075 = vmatpush1.msra.mxu0 0.0
    %1076 = vmatprep.subr.mxu0 0.0
    %1077 = vmatpush1.msra.mxu0 0.0
    %1078 = vmatprep.subr.mxu0 0.0
    %1079 = vmatpush1.msra.mxu0 0.0
    %1080 = vmatprep.subr.mxu0 0.0
    %1081 = vmatpush1.msra.mxu0 0.0
    %1082 = vmatprep.subr.mxu0 0.0
    %1083 = vmatpush1.msra.mxu0 0.0
    %1084 = vmatprep.subr.mxu0 0.0
    %1085 = vmatpush1.msra.mxu0 0.0
    %1086 = vmatprep.subr.mxu0 0.0
    %1087 = vmatpush1.msra.mxu0 0.0
    %1088 = vmatprep.subr.mxu0 0.0
    %1089 = vmatpush1.msra.mxu0 0.0
    %1090 = vmatprep.subr.mxu0 0.0
    %1091 = vmatpush1.msra.mxu0 0.0
    %1092 = vmatprep.subr.mxu0 0.0
    %1093 = vmatpush1.msra.mxu0 0.0
    %1094 = vmatprep.subr.mxu0 0.0
    %1095 = vmatpush1.msra.mxu0 0.0
    %1096 = vmatprep.subr.mxu0 0.0
    %1097 = vmatpush1.msra.mxu0 0.0
    %1098 = vmatprep.subr.mxu0 0.0
    %1099 = vmatpush1.msra.mxu0 0.0
    %1100 = vmatprep.subr.mxu0 0.0
    %1101 = vmatpush1.msra.mxu0 0.0
    %1102 = vmatprep.subr.mxu0 0.0
    %1103 = vmatpush1.msra.mxu0 0.0
    %1104 = vmatprep.subr.mxu0 0.0
    %1105 = vmatpush1.msra.mxu0 0.0
    %1106 = vmatprep.mubr.f32.mxu0 0.0
    %v1107 = vand.u32 %v534, 4294901760
    %1108 = vmatmul.mubr.f32.gmra.mrb[0].mxu0 %v1107
    %v1109 = vpop.f32.mrb[0].mxu0
    %v1110 = vadd.f32 %v991, %v1109
    %v1111 = vpop.f32.mrb[0].mxu0
    %1112 = vdwg.mxu0
    %1113 = vmatprep.subr.mxu0 0.0
    %v1114 = vand.u32 %v535, 4294901760
    %1115 = vmatpush1.msra.mxu0 %v1114
    %1116 = vmatprep.subr.mxu0 0.0
    %v1117 = vand.u32 %v536, 4294901760
    %1118 = vmatpush1.msra.mxu0 %v1117
    %1119 = vmatprep.subr.mxu0 0.0
    %v1120 = vand.u32 %v537, 4294901760
    %1121 = vmatpush1.msra.mxu0 %v1120
    %1122 = vmatprep.subr.mxu0 0.0
    %v1123 = vand.u32 %v538, 4294901760
    %1124 = vmatpush1.msra.mxu0 %v1123
    %1125 = vmatprep.subr.mxu0 0.0
    %v1126 = vand.u32 %v539, 4294901760
    %1127 = vmatpush1.msra.mxu0 %v1126
    %1128 = vmatprep.subr.mxu0 0.0
    %v1129 = vand.u32 %v540, 4294901760
    %1130 = vmatpush1.msra.mxu0 %v1129
    %1131 = vmatprep.subr.mxu0 0.0
    %v1132 = vand.u32 %v541, 4294901760
    %1133 = vmatpush1.msra.mxu0 %v1132
    %1134 = vmatprep.subr.mxu0 0.0
    %v1135 = vand.u32 %v542, 4294901760
    %1136 = vmatpush1.msra.mxu0 %v1135
    %1137 = vmatprep.subr.mxu0 0.0
    %v1138 = vand.u32 %v543, 4294901760
    %1139 = vmatpush1.msra.mxu0 %v1138
    %1140 = vmatprep.subr.mxu0 0.0
    %v1141 = vand.u32 %v544, 4294901760
    %1142 = vmatpush1.msra.mxu0 %v1141
    %1143 = vmatprep.subr.mxu0 0.0
    %v1144 = vand.u32 %v545, 4294901760
    %1145 = vmatpush1.msra.mxu0 %v1144
    %1146 = vmatprep.subr.mxu0 0.0
    %v1147 = vand.u32 %v546, 4294901760
    %1148 = vmatpush1.msra.mxu0 %v1147
    %1149 = vmatprep.subr.mxu0 0.0
    %v1150 = vand.u32 %v547, 4294901760
    %1151 = vmatpush1.msra.mxu0 %v1150
    %1152 = vmatprep.subr.mxu0 0.0
    %v1153 = vand.u32 %v548, 4294901760
    %1154 = vmatpush1.msra.mxu0 %v1153
    %1155 = vmatprep.subr.mxu0 0.0
    %v1156 = vand.u32 %v549, 4294901760
    %1157 = vmatpush1.msra.mxu0 %v1156
    %1158 = vmatprep.subr.mxu0 0.0
    %v1159 = vand.u32 %v550, 4294901760
    %1160 = vmatpush1.msra.mxu0 %v1159
    %1161 = vmatprep.subr.mxu0 0.0
    %1162 = vmatpush1.msra.mxu0 0.0
    %1163 = vmatprep.subr.mxu0 0.0
    %1164 = vmatpush1.msra.mxu0 0.0
    %1165 = vmatprep.subr.mxu0 0.0
    %1166 = vmatpush1.msra.mxu0 0.0
    %1167 = vmatprep.subr.mxu0 0.0
    %1168 = vmatpush1.msra.mxu0 0.0
    %1169 = vmatprep.subr.mxu0 0.0
    %1170 = vmatpush1.msra.mxu0 0.0
    %1171 = vmatprep.subr.mxu0 0.0
    %1172 = vmatpush1.msra.mxu0 0.0
    %1173 = vmatprep.subr.mxu0 0.0
    %1174 = vmatpush1.msra.mxu0 0.0
    %1175 = vmatprep.subr.mxu0 0.0
    %1176 = vmatpush1.msra.mxu0 0.0
    %1177 = vmatprep.subr.mxu0 0.0
    %1178 = vmatpush1.msra.mxu0 0.0
    %1179 = vmatprep.subr.mxu0 0.0
    %1180 = vmatpush1.msra.mxu0 0.0
    %1181 = vmatprep.subr.mxu0 0.0
    %1182 = vmatpush1.msra.mxu0 0.0
    %1183 = vmatprep.subr.mxu0 0.0
    %1184 = vmatpush1.msra.mxu0 0.0
    %1185 = vmatprep.subr.mxu0 0.0
    %1186 = vmatpush1.msra.mxu0 0.0
    %1187 = vmatprep.subr.mxu0 0.0
    %1188 = vmatpush1.msra.mxu0 0.0
    %1189 = vmatprep.subr.mxu0 0.0
    %1190 = vmatpush1.msra.mxu0 0.0
    %1191 = vmatprep.subr.mxu0 0.0
    %1192 = vmatpush1.msra.mxu0 0.0
    %1193 = vmatprep.mubr.f32.mxu0 0.0
    %v1194 = vand.u32 %v534, 4294901760
    %1195 = vmatmul.mubr.f32.gmra.mrb[0].mxu0 %v1194
    %v1196 = vpop.f32.mrb[0].mxu0
    %v1197 = vadd.f32 %v1110, %v1196
    %v1198 = vpop.f32.mrb[0].mxu0
    %1199 = vdwg.mxu0
    %v1200 = vmax.f32 %v1197, 0.0
    %s1201 = scalar_lea.vmem [#allocation7], 128
    %v1202 = vld [vmem:[%s1201] sm:$0xff]
    %v1203 = vld [vmem:[%s1201 + $0x8] sm:$0xff]
    %v1204 = vld [vmem:[%s1201 + $0x10] sm:$0xff]
    %v1205 = vld [vmem:[%s1201 + $0x18] sm:$0xff]
    %v1206 = vld [vmem:[%s1201 + $0x20] sm:$0xff]
    %v1207 = vld [vmem:[%s1201 + $0x28] sm:$0xff]
    %v1208 = vld [vmem:[%s1201 + $0x30] sm:$0xff]
    %v1209 = vld [vmem:[%s1201 + $0x38] sm:$0xff]
    %v1210 = vld [vmem:[%s1201 + $0x40] sm:$0xff]
    %v1211 = vld [vmem:[%s1201 + $0x48] sm:$0xff]
    %v1212 = vld [vmem:[%s1201 + $0x50] sm:$0xff]
    %v1213 = vld [vmem:[%s1201 + $0x58] sm:$0xff]
    %v1214 = vld [vmem:[%s1201 + $0x60] sm:$0xff]
    %v1215 = vld [vmem:[%s1201 + $0x68] sm:$0xff]
    %v1216 = vld [vmem:[%s1201 + $0x70] sm:$0xff]
    %v1217 = vld [vmem:[%s1201 + $0x78] sm:$0xff]
    %s1218 = scalar_lea.vmem %s3, 2
    %v1219 = vld [vmem:[%s1218] sm:$0x1]
    %v1221 = vlaneseq
    %v1222 = vshrl.u32 %v1221, 7
    %v1223 = vsub.s32 0, %v1222
    %v1224 = vrot.slane %v1219, %v1223
    %1226 = vmatprep.subr.mxu0 0.0
    %v1227 = vand.u32 %v1202, 4294901760
    %1228 = vmatpush1.msra.mxu0 %v1227
    %1229 = vmatprep.subr.mxu0 0.0
    %v1230 = vand.u32 %v1203, 4294901760
    %1231 = vmatpush1.msra.mxu0 %v1230
    %1232 = vmatprep.subr.mxu0 0.0
    %v1233 = vand.u32 %v1204, 4294901760
    %1234 = vmatpush1.msra.mxu0 %v1233
    %1235 = vmatprep.subr.mxu0 0.0
    %v1236 = vand.u32 %v1205, 4294901760
    %1237 = vmatpush1.msra.mxu0 %v1236
    %1238 = vmatprep.subr.mxu0 0.0
    %v1239 = vand.u32 %v1206, 4294901760
    %1240 = vmatpush1.msra.mxu0 %v1239
    %1241 = vmatprep.subr.mxu0 0.0
    %v1242 = vand.u32 %v1207, 4294901760
    %1243 = vmatpush1.msra.mxu0 %v1242
    %1244 = vmatprep.subr.mxu0 0.0
    %v1245 = vand.u32 %v1208, 4294901760
    %1246 = vmatpush1.msra.mxu0 %v1245
    %1247 = vmatprep.subr.mxu0 0.0
    %v1248 = vand.u32 %v1209, 4294901760
    %1249 = vmatpush1.msra.mxu0 %v1248
    %1250 = vmatprep.subr.mxu0 0.0
    %v1251 = vand.u32 %v1210, 4294901760
    %1252 = vmatpush1.msra.mxu0 %v1251
    %1253 = vmatprep.subr.mxu0 0.0
    %v1254 = vand.u32 %v1211, 4294901760
    %1255 = vmatpush1.msra.mxu0 %v1254
    %1256 = vmatprep.subr.mxu0 0.0
    %v1257 = vand.u32 %v1212, 4294901760
    %1258 = vmatpush1.msra.mxu0 %v1257
    %1259 = vmatprep.subr.mxu0 0.0
    %v1260 = vand.u32 %v1213, 4294901760
    %1261 = vmatpush1.msra.mxu0 %v1260
    %1262 = vmatprep.subr.mxu0 0.0
    %v1263 = vand.u32 %v1214, 4294901760
    %1264 = vmatpush1.msra.mxu0 %v1263
    %1265 = vmatprep.subr.mxu0 0.0
    %v1266 = vand.u32 %v1215, 4294901760
    %1267 = vmatpush1.msra.mxu0 %v1266
    %1268 = vmatprep.subr.mxu0 0.0
    %v1269 = vand.u32 %v1216, 4294901760
    %1270 = vmatpush1.msra.mxu0 %v1269
    %1271 = vmatprep.subr.mxu0 0.0
    %v1272 = vand.u32 %v1217, 4294901760
    %1273 = vmatpush1.msra.mxu0 %v1272
    %1274 = vmatprep.subr.mxu0 0.0
    %1275 = vmatpush1.msra.mxu0 0.0
    %1276 = vmatprep.subr.mxu0 0.0
    %1277 = vmatpush1.msra.mxu0 0.0
    %1278 = vmatprep.subr.mxu0 0.0
    %1279 = vmatpush1.msra.mxu0 0.0
    %1280 = vmatprep.subr.mxu0 0.0
    %1281 = vmatpush1.msra.mxu0 0.0
    %1282 = vmatprep.subr.mxu0 0.0
    %1283 = vmatpush1.msra.mxu0 0.0
    %1284 = vmatprep.subr.mxu0 0.0
    %1285 = vmatpush1.msra.mxu0 0.0
    %1286 = vmatprep.subr.mxu0 0.0
    %1287 = vmatpush1.msra.mxu0 0.0
    %1288 = vmatprep.subr.mxu0 0.0
    %1289 = vmatpush1.msra.mxu0 0.0
    %1290 = vmatprep.subr.mxu0 0.0
    %1291 = vmatpush1.msra.mxu0 0.0
    %1292 = vmatprep.subr.mxu0 0.0
    %1293 = vmatpush1.msra.mxu0 0.0
    %1294 = vmatprep.subr.mxu0 0.0
    %1295 = vmatpush1.msra.mxu0 0.0
    %1296 = vmatprep.subr.mxu0 0.0
    %1297 = vmatpush1.msra.mxu0 0.0
    %1298 = vmatprep.subr.mxu0 0.0
    %1299 = vmatpush1.msra.mxu0 0.0
    %1300 = vmatprep.subr.mxu0 0.0
    %1301 = vmatpush1.msra.mxu0 0.0
    %1302 = vmatprep.subr.mxu0 0.0
    %1303 = vmatpush1.msra.mxu0 0.0
    %1304 = vmatprep.subr.mxu0 0.0
    %1305 = vmatpush1.msra.mxu0 0.0
    %1306 = vmatprep.mubr.f32.mxu0 0.0
    %v1307 = vand.u32 %v1200, 4294901760
    %v1308 = vsub.f32 %v1200, %v1307
    %v1309 = vand.u32 %v1308, 4294901760
    %v1310 = vsub.f32 %v1308, %v1309
    %v1311 = vand.u32 %v1310, 4294901760
    %1312 = vmatmul.mubr.f32.gmra.mrb[0].mxu0 %v1311
    %v1313 = vpop.f32.mrb[0].mxu0
    %v1314 = vadd.f32 %v1224, %v1313
    %v1315 = vpop.f32.mrb[0].mxu0
    %1316 = vdwg.mxu0
    %1317 = vmatprep.subr.mxu0 0.0
    %v1318 = vand.u32 %v1202, 4294901760
    %v1319 = vsub.f32 %v1202, %v1318
    %v1320 = vand.u32 %v1319, 4294901760
    %v1321 = vsub.f32 %v1319, %v1320
    %v1322 = vand.u32 %v1321, 4294901760
    %1323 = vmatpush1.msra.mxu0 %v1322
    %1324 = vmatprep.subr.mxu0 0.0
    %v1325 = vand.u32 %v1203, 4294901760
    %v1326 = vsub.f32 %v1203, %v1325
    %v1327 = vand.u32 %v1326, 4294901760
    %v1328 = vsub.f32 %v1326, %v1327
    %v1329 = vand.u32 %v1328, 4294901760
    %1330 = vmatpush1.msra.mxu0 %v1329
    %1331 = vmatprep.subr.mxu0 0.0
    %v1332 = vand.u32 %v1204, 4294901760
    %v1333 = vsub.f32 %v1204, %v1332
    %v1334 = vand.u32 %v1333, 4294901760
    %v1335 = vsub.f32 %v1333, %v1334
    %v1336 = vand.u32 %v1335, 4294901760
    %1337 = vmatpush1.msra.mxu0 %v1336
    %1338 = vmatprep.subr.mxu0 0.0
    %v1339 = vand.u32 %v1205, 4294901760
    %v1340 = vsub.f32 %v1205, %v1339
    %v1341 = vand.u32 %v1340, 4294901760
    %v1342 = vsub.f32 %v1340, %v1341
    %v1343 = vand.u32 %v1342, 4294901760
    %1344 = vmatpush1.msra.mxu0 %v1343
    %1345 = vmatprep.subr.mxu0 0.0
    %v1346 = vand.u32 %v1206, 4294901760
    %v1347 = vsub.f32 %v1206, %v1346
    %v1348 = vand.u32 %v1347, 4294901760
    %v1349 = vsub.f32 %v1347, %v1348
    %v1350 = vand.u32 %v1349, 4294901760
    %1351 = vmatpush1.msra.mxu0 %v1350
    %1352 = vmatprep.subr.mxu0 0.0
    %v1353 = vand.u32 %v1207, 4294901760
    %v1354 = vsub.f32 %v1207, %v1353
    %v1355 = vand.u32 %v1354, 4294901760
    %v1356 = vsub.f32 %v1354, %v1355
    %v1357 = vand.u32 %v1356, 4294901760
    %1358 = vmatpush1.msra.mxu0 %v1357
    %1359 = vmatprep.subr.mxu0 0.0
    %v1360 = vand.u32 %v1208, 4294901760
    %v1361 = vsub.f32 %v1208, %v1360
    %v1362 = vand.u32 %v1361, 4294901760
    %v1363 = vsub.f32 %v1361, %v1362
    %v1364 = vand.u32 %v1363, 4294901760
    %1365 = vmatpush1.msra.mxu0 %v1364
    %1366 = vmatprep.subr.mxu0 0.0
    %v1367 = vand.u32 %v1209, 4294901760
    %v1368 = vsub.f32 %v1209, %v1367
    %v1369 = vand.u32 %v1368, 4294901760
    %v1370 = vsub.f32 %v1368, %v1369
    %v1371 = vand.u32 %v1370, 4294901760
    %1372 = vmatpush1.msra.mxu0 %v1371
    %1373 = vmatprep.subr.mxu0 0.0
    %v1374 = vand.u32 %v1210, 4294901760
    %v1375 = vsub.f32 %v1210, %v1374
    %v1376 = vand.u32 %v1375, 4294901760
    %v1377 = vsub.f32 %v1375, %v1376
    %v1378 = vand.u32 %v1377, 4294901760
    %1379 = vmatpush1.msra.mxu0 %v1378
    %1380 = vmatprep.subr.mxu0 0.0
    %v1381 = vand.u32 %v1211, 4294901760
    %v1382 = vsub.f32 %v1211, %v1381
    %v1383 = vand.u32 %v1382, 4294901760
    %v1384 = vsub.f32 %v1382, %v1383
    %v1385 = vand.u32 %v1384, 4294901760
    %1386 = vmatpush1.msra.mxu0 %v1385
    %1387 = vmatprep.subr.mxu0 0.0
    %v1388 = vand.u32 %v1212, 4294901760
    %v1389 = vsub.f32 %v1212, %v1388
    %v1390 = vand.u32 %v1389, 4294901760
    %v1391 = vsub.f32 %v1389, %v1390
    %v1392 = vand.u32 %v1391, 4294901760
    %1393 = vmatpush1.msra.mxu0 %v1392
    %1394 = vmatprep.subr.mxu0 0.0
    %v1395 = vand.u32 %v1213, 4294901760
    %v1396 = vsub.f32 %v1213, %v1395
    %v1397 = vand.u32 %v1396, 4294901760
    %v1398 = vsub.f32 %v1396, %v1397
    %v1399 = vand.u32 %v1398, 4294901760
    %1400 = vmatpush1.msra.mxu0 %v1399
    %1401 = vmatprep.subr.mxu0 0.0
    %v1402 = vand.u32 %v1214, 4294901760
    %v1403 = vsub.f32 %v1214, %v1402
    %v1404 = vand.u32 %v1403, 4294901760
    %v1405 = vsub.f32 %v1403, %v1404
    %v1406 = vand.u32 %v1405, 4294901760
    %1407 = vmatpush1.msra.mxu0 %v1406
    %1408 = vmatprep.subr.mxu0 0.0
    %v1409 = vand.u32 %v1215, 4294901760
    %v1410 = vsub.f32 %v1215, %v1409
    %v1411 = vand.u32 %v1410, 4294901760
    %v1412 = vsub.f32 %v1410, %v1411
    %v1413 = vand.u32 %v1412, 4294901760
    %1414 = vmatpush1.msra.mxu0 %v1413
    %1415 = vmatprep.subr.mxu0 0.0
    %v1416 = vand.u32 %v1216, 4294901760
    %v1417 = vsub.f32 %v1216, %v1416
    %v1418 = vand.u32 %v1417, 4294901760
    %v1419 = vsub.f32 %v1417, %v1418
    %v1420 = vand.u32 %v1419, 4294901760
    %1421 = vmatpush1.msra.mxu0 %v1420
    %1422 = vmatprep.subr.mxu0 0.0
    %v1423 = vand.u32 %v1217, 4294901760
    %v1424 = vsub.f32 %v1217, %v1423
    %v1425 = vand.u32 %v1424, 4294901760
    %v1426 = vsub.f32 %v1424, %v1425
    %v1427 = vand.u32 %v1426, 4294901760
    %1428 = vmatpush1.msra.mxu0 %v1427
    %1429 = vmatprep.subr.mxu0 0.0
    %1430 = vmatpush1.msra.mxu0 0.0
    %1431 = vmatprep.subr.mxu0 0.0
    %1432 = vmatpush1.msra.mxu0 0.0
    %1433 = vmatprep.subr.mxu0 0.0
    %1434 = vmatpush1.msra.mxu0 0.0
    %1435 = vmatprep.subr.mxu0 0.0
    %1436 = vmatpush1.msra.mxu0 0.0
    %1437 = vmatprep.subr.mxu0 0.0
    %1438 = vmatpush1.msra.mxu0 0.0
    %1439 = vmatprep.subr.mxu0 0.0
    %1440 = vmatpush1.msra.mxu0 0.0
    %1441 = vmatprep.subr.mxu0 0.0
    %1442 = vmatpush1.msra.mxu0 0.0
    %1443 = vmatprep.subr.mxu0 0.0
    %1444 = vmatpush1.msra.mxu0 0.0
    %1445 = vmatprep.subr.mxu0 0.0
    %1446 = vmatpush1.msra.mxu0 0.0
    %1447 = vmatprep.subr.mxu0 0.0
    %1448 = vmatpush1.msra.mxu0 0.0
    %1449 = vmatprep.subr.mxu0 0.0
    %1450 = vmatpush1.msra.mxu0 0.0
    %1451 = vmatprep.subr.mxu0 0.0
    %1452 = vmatpush1.msra.mxu0 0.0
    %1453 = vmatprep.subr.mxu0 0.0
    %1454 = vmatpush1.msra.mxu0 0.0
    %1455 = vmatprep.subr.mxu0 0.0
    %1456 = vmatpush1.msra.mxu0 0.0
    %1457 = vmatprep.subr.mxu0 0.0
    %1458 = vmatpush1.msra.mxu0 0.0
    %1459 = vmatprep.subr.mxu0 0.0
    %1460 = vmatpush1.msra.mxu0 0.0
    %1461 = vmatprep.mubr.f32.mxu0 0.0
    %v1462 = vand.u32 %v1200, 4294901760
    %1463 = vmatmul.mubr.f32.gmra.mrb[0].mxu0 %v1462
    %v1464 = vpop.f32.mrb[0].mxu0
    %v1465 = vadd.f32 %v1314, %v1464
    %v1466 = vpop.f32.mrb[0].mxu0
    %1467 = vdwg.mxu0
    %1468 = vmatprep.subr.mxu0 0.0
    %v1469 = vand.u32 %v1202, 4294901760
    %v1470 = vsub.f32 %v1202, %v1469
    %1471 = vmatpush1.msra.mxu0 %v1470
    %1472 = vmatprep.subr.mxu0 0.0
    %v1473 = vand.u32 %v1203, 4294901760
    %v1474 = vsub.f32 %v1203, %v1473
    %1475 = vmatpush1.msra.mxu0 %v1474
    %1476 = vmatprep.subr.mxu0 0.0
    %v1477 = vand.u32 %v1204, 4294901760
    %v1478 = vsub.f32 %v1204, %v1477
    %1479 = vmatpush1.msra.mxu0 %v1478
    %1480 = vmatprep.subr.mxu0 0.0
    %v1481 = vand.u32 %v1205, 4294901760
    %v1482 = vsub.f32 %v1205, %v1481
    %1483 = vmatpush1.msra.mxu0 %v1482
    %1484 = vmatprep.subr.mxu0 0.0
    %v1485 = vand.u32 %v1206, 4294901760
    %v1486 = vsub.f32 %v1206, %v1485
    %1487 = vmatpush1.msra.mxu0 %v1486
    %1488 = vmatprep.subr.mxu0 0.0
    %v1489 = vand.u32 %v1207, 4294901760
    %v1490 = vsub.f32 %v1207, %v1489
    %1491 = vmatpush1.msra.mxu0 %v1490
    %1492 = vmatprep.subr.mxu0 0.0
    %v1493 = vand.u32 %v1208, 4294901760
    %v1494 = vsub.f32 %v1208, %v1493
    %1495 = vmatpush1.msra.mxu0 %v1494
    %1496 = vmatprep.subr.mxu0 0.0
    %v1497 = vand.u32 %v1209, 4294901760
    %v1498 = vsub.f32 %v1209, %v1497
    %1499 = vmatpush1.msra.mxu0 %v1498
    %1500 = vmatprep.subr.mxu0 0.0
    %v1501 = vand.u32 %v1210, 4294901760
    %v1502 = vsub.f32 %v1210, %v1501
    %1503 = vmatpush1.msra.mxu0 %v1502
    %1504 = vmatprep.subr.mxu0 0.0
    %v1505 = vand.u32 %v1211, 4294901760
    %v1506 = vsub.f32 %v1211, %v1505
    %1507 = vmatpush1.msra.mxu0 %v1506
    %1508 = vmatprep.subr.mxu0 0.0
    %v1509 = vand.u32 %v1212, 4294901760
    %v1510 = vsub.f32 %v1212, %v1509
    %1511 = vmatpush1.msra.mxu0 %v1510
    %1512 = vmatprep.subr.mxu0 0.0
    %v1513 = vand.u32 %v1213, 4294901760
    %v1514 = vsub.f32 %v1213, %v1513
    %1515 = vmatpush1.msra.mxu0 %v1514
    %1516 = vmatprep.subr.mxu0 0.0
    %v1517 = vand.u32 %v1214, 4294901760
    %v1518 = vsub.f32 %v1214, %v1517
    %1519 = vmatpush1.msra.mxu0 %v1518
    %1520 = vmatprep.subr.mxu0 0.0
    %v1521 = vand.u32 %v1215, 4294901760
    %v1522 = vsub.f32 %v1215, %v1521
    %1523 = vmatpush1.msra.mxu0 %v1522
    %1524 = vmatprep.subr.mxu0 0.0
    %v1525 = vand.u32 %v1216, 4294901760
    %v1526 = vsub.f32 %v1216, %v1525
    %1527 = vmatpush1.msra.mxu0 %v1526
    %1528 = vmatprep.subr.mxu0 0.0
    %v1529 = vand.u32 %v1217, 4294901760
    %v1530 = vsub.f32 %v1217, %v1529
    %1531 = vmatpush1.msra.mxu0 %v1530
    %1532 = vmatprep.subr.mxu0 0.0
    %1533 = vmatpush1.msra.mxu0 0.0
    %1534 = vmatprep.subr.mxu0 0.0
    %1535 = vmatpush1.msra.mxu0 0.0
    %1536 = vmatprep.subr.mxu0 0.0
    %1537 = vmatpush1.msra.mxu0 0.0
    %1538 = vmatprep.subr.mxu0 0.0
    %1539 = vmatpush1.msra.mxu0 0.0
    %1540 = vmatprep.subr.mxu0 0.0
    %1541 = vmatpush1.msra.mxu0 0.0
    %1542 = vmatprep.subr.mxu0 0.0
    %1543 = vmatpush1.msra.mxu0 0.0
    %1544 = vmatprep.subr.mxu0 0.0
    %1545 = vmatpush1.msra.mxu0 0.0
    %1546 = vmatprep.subr.mxu0 0.0
    %1547 = vmatpush1.msra.mxu0 0.0
    %1548 = vmatprep.subr.mxu0 0.0
    %1549 = vmatpush1.msra.mxu0 0.0
    %1550 = vmatprep.subr.mxu0 0.0
    %1551 = vmatpush1.msra.mxu0 0.0
    %1552 = vmatprep.subr.mxu0 0.0
    %1553 = vmatpush1.msra.mxu0 0.0
    %1554 = vmatprep.subr.mxu0 0.0
    %1555 = vmatpush1.msra.mxu0 0.0
    %1556 = vmatprep.subr.mxu0 0.0
    %1557 = vmatpush1.msra.mxu0 0.0
    %1558 = vmatprep.subr.mxu0 0.0
    %1559 = vmatpush1.msra.mxu0 0.0
    %1560 = vmatprep.subr.mxu0 0.0
    %1561 = vmatpush1.msra.mxu0 0.0
    %1562 = vmatprep.subr.mxu0 0.0
    %1563 = vmatpush1.msra.mxu0 0.0
    %1564 = vmatprep.mubr.f32.mxu0 0.0
    %v1565 = vand.u32 %v1200, 4294901760
    %v1566 = vsub.f32 %v1200, %v1565
    %1567 = vmatmul.mubr.f32.gmra.mrb[0].mxu0 %v1566
    %v1568 = vpop.f32.mrb[0].mxu0
    %v1569 = vadd.f32 %v1465, %v1568
    %v1570 = vpop.f32.mrb[0].mxu0
    %1571 = vdwg.mxu0
    %1572 = vmatprep.subr.mxu0 0.0
    %v1573 = vand.u32 %v1202, 4294901760
    %1574 = vmatpush1.msra.mxu0 %v1573
    %1575 = vmatprep.subr.mxu0 0.0
    %v1576 = vand.u32 %v1203, 4294901760
    %1577 = vmatpush1.msra.mxu0 %v1576
    %1578 = vmatprep.subr.mxu0 0.0
    %v1579 = vand.u32 %v1204, 4294901760
    %1580 = vmatpush1.msra.mxu0 %v1579
    %1581 = vmatprep.subr.mxu0 0.0
    %v1582 = vand.u32 %v1205, 4294901760
    %1583 = vmatpush1.msra.mxu0 %v1582
    %1584 = vmatprep.subr.mxu0 0.0
    %v1585 = vand.u32 %v1206, 4294901760
    %1586 = vmatpush1.msra.mxu0 %v1585
    %1587 = vmatprep.subr.mxu0 0.0
    %v1588 = vand.u32 %v1207, 4294901760
    %1589 = vmatpush1.msra.mxu0 %v1588
    %1590 = vmatprep.subr.mxu0 0.0
    %v1591 = vand.u32 %v1208, 4294901760
    %1592 = vmatpush1.msra.mxu0 %v1591
    %1593 = vmatprep.subr.mxu0 0.0
    %v1594 = vand.u32 %v1209, 4294901760
    %1595 = vmatpush1.msra.mxu0 %v1594
    %1596 = vmatprep.subr.mxu0 0.0
    %v1597 = vand.u32 %v1210, 4294901760
    %1598 = vmatpush1.msra.mxu0 %v1597
    %1599 = vmatprep.subr.mxu0 0.0
    %v1600 = vand.u32 %v1211, 4294901760
    %1601 = vmatpush1.msra.mxu0 %v1600
    %1602 = vmatprep.subr.mxu0 0.0
    %v1603 = vand.u32 %v1212, 4294901760
    %1604 = vmatpush1.msra.mxu0 %v1603
    %1605 = vmatprep.subr.mxu0 0.0
    %v1606 = vand.u32 %v1213, 4294901760
    %1607 = vmatpush1.msra.mxu0 %v1606
    %1608 = vmatprep.subr.mxu0 0.0
    %v1609 = vand.u32 %v1214, 4294901760
    %1610 = vmatpush1.msra.mxu0 %v1609
    %1611 = vmatprep.subr.mxu0 0.0
    %v1612 = vand.u32 %v1215, 4294901760
    %1613 = vmatpush1.msra.mxu0 %v1612
    %1614 = vmatprep.subr.mxu0 0.0
    %v1615 = vand.u32 %v1216, 4294901760
    %1616 = vmatpush1.msra.mxu0 %v1615
    %1617 = vmatprep.subr.mxu0 0.0
    %v1618 = vand.u32 %v1217, 4294901760
    %1619 = vmatpush1.msra.mxu0 %v1618
    %1620 = vmatprep.subr.mxu0 0.0
    %1621 = vmatpush1.msra.mxu0 0.0
    %1622 = vmatprep.subr.mxu0 0.0
    %1623 = vmatpush1.msra.mxu0 0.0
    %1624 = vmatprep.subr.mxu0 0.0
    %1625 = vmatpush1.msra.mxu0 0.0
    %1626 = vmatprep.subr.mxu0 0.0
    %1627 = vmatpush1.msra.mxu0 0.0
    %1628 = vmatprep.subr.mxu0 0.0
    %1629 = vmatpush1.msra.mxu0 0.0
    %1630 = vmatprep.subr.mxu0 0.0
    %1631 = vmatpush1.msra.mxu0 0.0
    %1632 = vmatprep.subr.mxu0 0.0
    %1633 = vmatpush1.msra.mxu0 0.0
    %1634 = vmatprep.subr.mxu0 0.0
    %1635 = vmatpush1.msra.mxu0 0.0
    %1636 = vmatprep.subr.mxu0 0.0
    %1637 = vmatpush1.msra.mxu0 0.0
    %1638 = vmatprep.subr.mxu0 0.0
    %1639 = vmatpush1.msra.mxu0 0.0
    %1640 = vmatprep.subr.mxu0 0.0
    %1641 = vmatpush1.msra.mxu0 0.0
    %1642 = vmatprep.subr.mxu0 0.0
    %1643 = vmatpush1.msra.mxu0 0.0
    %1644 = vmatprep.subr.mxu0 0.0
    %1645 = vmatpush1.msra.mxu0 0.0
    %1646 = vmatprep.subr.mxu0 0.0
    %1647 = vmatpush1.msra.mxu0 0.0
    %1648 = vmatprep.subr.mxu0 0.0
    %1649 = vmatpush1.msra.mxu0 0.0
    %1650 = vmatprep.subr.mxu0 0.0
    %1651 = vmatpush1.msra.mxu0 0.0
    %1652 = vmatprep.mubr.f32.mxu0 0.0
    %v1653 = vand.u32 %v1200, 4294901760
    %v1654 = vsub.f32 %v1200, %v1653
    %v1655 = vand.u32 %v1654, 4294901760
    %1656 = vmatmul.mubr.f32.gmra.mrb[0].mxu0 %v1655
    %v1657 = vpop.f32.mrb[0].mxu0
    %v1658 = vadd.f32 %v1569, %v1657
    %v1659 = vpop.f32.mrb[0].mxu0
    %1660 = vdwg.mxu0
    %1661 = vmatprep.subr.mxu0 0.0
    %v1662 = vand.u32 %v1202, 4294901760
    %v1663 = vsub.f32 %v1202, %v1662
    %v1664 = vand.u32 %v1663, 4294901760
    %1665 = vmatpush1.msra.mxu0 %v1664
    %1666 = vmatprep.subr.mxu0 0.0
    %v1667 = vand.u32 %v1203, 4294901760
    %v1668 = vsub.f32 %v1203, %v1667
    %v1669 = vand.u32 %v1668, 4294901760
    %1670 = vmatpush1.msra.mxu0 %v1669
    %1671 = vmatprep.subr.mxu0 0.0
    %v1672 = vand.u32 %v1204, 4294901760
    %v1673 = vsub.f32 %v1204, %v1672
    %v1674 = vand.u32 %v1673, 4294901760
    %1675 = vmatpush1.msra.mxu0 %v1674
    %1676 = vmatprep.subr.mxu0 0.0
    %v1677 = vand.u32 %v1205, 4294901760
    %v1678 = vsub.f32 %v1205, %v1677
    %v1679 = vand.u32 %v1678, 4294901760
    %1680 = vmatpush1.msra.mxu0 %v1679
    %1681 = vmatprep.subr.mxu0 0.0
    %v1682 = vand.u32 %v1206, 4294901760
    %v1683 = vsub.f32 %v1206, %v1682
    %v1684 = vand.u32 %v1683, 4294901760
    %1685 = vmatpush1.msra.mxu0 %v1684
    %1686 = vmatprep.subr.mxu0 0.0
    %v1687 = vand.u32 %v1207, 4294901760
    %v1688 = vsub.f32 %v1207, %v1687
    %v1689 = vand.u32 %v1688, 4294901760
    %1690 = vmatpush1.msra.mxu0 %v1689
    %1691 = vmatprep.subr.mxu0 0.0
    %v1692 = vand.u32 %v1208, 4294901760
    %v1693 = vsub.f32 %v1208, %v1692
    %v1694 = vand.u32 %v1693, 4294901760
    %1695 = vmatpush1.msra.mxu0 %v1694
    %1696 = vmatprep.subr.mxu0 0.0
    %v1697 = vand.u32 %v1209, 4294901760
    %v1698 = vsub.f32 %v1209, %v1697
    %v1699 = vand.u32 %v1698, 4294901760
    %1700 = vmatpush1.msra.mxu0 %v1699
    %1701 = vmatprep.subr.mxu0 0.0
    %v1702 = vand.u32 %v1210, 4294901760
    %v1703 = vsub.f32 %v1210, %v1702
    %v1704 = vand.u32 %v1703, 4294901760
    %1705 = vmatpush1.msra.mxu0 %v1704
    %1706 = vmatprep.subr.mxu0 0.0
    %v1707 = vand.u32 %v1211, 4294901760
    %v1708 = vsub.f32 %v1211, %v1707
    %v1709 = vand.u32 %v1708, 4294901760
    %1710 = vmatpush1.msra.mxu0 %v1709
    %1711 = vmatprep.subr.mxu0 0.0
    %v1712 = vand.u32 %v1212, 4294901760
    %v1713 = vsub.f32 %v1212, %v1712
    %v1714 = vand.u32 %v1713, 4294901760
    %1715 = vmatpush1.msra.mxu0 %v1714
    %1716 = vmatprep.subr.mxu0 0.0
    %v1717 = vand.u32 %v1213, 4294901760
    %v1718 = vsub.f32 %v1213, %v1717
    %v1719 = vand.u32 %v1718, 4294901760
    %1720 = vmatpush1.msra.mxu0 %v1719
    %1721 = vmatprep.subr.mxu0 0.0
    %v1722 = vand.u32 %v1214, 4294901760
    %v1723 = vsub.f32 %v1214, %v1722
    %v1724 = vand.u32 %v1723, 4294901760
    %1725 = vmatpush1.msra.mxu0 %v1724
    %1726 = vmatprep.subr.mxu0 0.0
    %v1727 = vand.u32 %v1215, 4294901760
    %v1728 = vsub.f32 %v1215, %v1727
    %v1729 = vand.u32 %v1728, 4294901760
    %1730 = vmatpush1.msra.mxu0 %v1729
    %1731 = vmatprep.subr.mxu0 0.0
    %v1732 = vand.u32 %v1216, 4294901760
    %v1733 = vsub.f32 %v1216, %v1732
    %v1734 = vand.u32 %v1733, 4294901760
    %1735 = vmatpush1.msra.mxu0 %v1734
    %1736 = vmatprep.subr.mxu0 0.0
    %v1737 = vand.u32 %v1217, 4294901760
    %v1738 = vsub.f32 %v1217, %v1737
    %v1739 = vand.u32 %v1738, 4294901760
    %1740 = vmatpush1.msra.mxu0 %v1739
    %1741 = vmatprep.subr.mxu0 0.0
    %1742 = vmatpush1.msra.mxu0 0.0
    %1743 = vmatprep.subr.mxu0 0.0
    %1744 = vmatpush1.msra.mxu0 0.0
    %1745 = vmatprep.subr.mxu0 0.0
    %1746 = vmatpush1.msra.mxu0 0.0
    %1747 = vmatprep.subr.mxu0 0.0
    %1748 = vmatpush1.msra.mxu0 0.0
    %1749 = vmatprep.subr.mxu0 0.0
    %1750 = vmatpush1.msra.mxu0 0.0
    %1751 = vmatprep.subr.mxu0 0.0
    %1752 = vmatpush1.msra.mxu0 0.0
    %1753 = vmatprep.subr.mxu0 0.0
    %1754 = vmatpush1.msra.mxu0 0.0
    %1755 = vmatprep.subr.mxu0 0.0
    %1756 = vmatpush1.msra.mxu0 0.0
    %1757 = vmatprep.subr.mxu0 0.0
    %1758 = vmatpush1.msra.mxu0 0.0
    %1759 = vmatprep.subr.mxu0 0.0
    %1760 = vmatpush1.msra.mxu0 0.0
    %1761 = vmatprep.subr.mxu0 0.0
    %1762 = vmatpush1.msra.mxu0 0.0
    %1763 = vmatprep.subr.mxu0 0.0
    %1764 = vmatpush1.msra.mxu0 0.0
    %1765 = vmatprep.subr.mxu0 0.0
    %1766 = vmatpush1.msra.mxu0 0.0
    %1767 = vmatprep.subr.mxu0 0.0
    %1768 = vmatpush1.msra.mxu0 0.0
    %1769 = vmatprep.subr.mxu0 0.0
    %1770 = vmatpush1.msra.mxu0 0.0
    %1771 = vmatprep.subr.mxu0 0.0
    %1772 = vmatpush1.msra.mxu0 0.0
    %1773 = vmatprep.mubr.f32.mxu0 0.0
    %v1774 = vand.u32 %v1200, 4294901760
    %1775 = vmatmul.mubr.f32.gmra.mrb[0].mxu0 %v1774
    %v1776 = vpop.f32.mrb[0].mxu0
    %v1777 = vadd.f32 %v1658, %v1776
    %v1778 = vpop.f32.mrb[0].mxu0
    %1779 = vdwg.mxu0
    %1780 = vmatprep.subr.mxu0 0.0
    %v1781 = vand.u32 %v1202, 4294901760
    %1782 = vmatpush1.msra.mxu0 %v1781
    %1783 = vmatprep.subr.mxu0 0.0
    %v1784 = vand.u32 %v1203, 4294901760
    %1785 = vmatpush1.msra.mxu0 %v1784
    %1786 = vmatprep.subr.mxu0 0.0
    %v1787 = vand.u32 %v1204, 4294901760
    %1788 = vmatpush1.msra.mxu0 %v1787
    %1789 = vmatprep.subr.mxu0 0.0
    %v1790 = vand.u32 %v1205, 4294901760
    %1791 = vmatpush1.msra.mxu0 %v1790
    %1792 = vmatprep.subr.mxu0 0.0
    %v1793 = vand.u32 %v1206, 4294901760
    %1794 = vmatpush1.msra.mxu0 %v1793
    %1795 = vmatprep.subr.mxu0 0.0
    %v1796 = vand.u32 %v1207, 4294901760
    %1797 = vmatpush1.msra.mxu0 %v1796
    %1798 = vmatprep.subr.mxu0 0.0
    %v1799 = vand.u32 %v1208, 4294901760
    %1800 = vmatpush1.msra.mxu0 %v1799
    %1801 = vmatprep.subr.mxu0 0.0
    %v1802 = vand.u32 %v1209, 4294901760
    %1803 = vmatpush1.msra.mxu0 %v1802
    %1804 = vmatprep.subr.mxu0 0.0
    %v1805 = vand.u32 %v1210, 4294901760
    %1806 = vmatpush1.msra.mxu0 %v1805
    %1807 = vmatprep.subr.mxu0 0.0
    %v1808 = vand.u32 %v1211, 4294901760
    %1809 = vmatpush1.msra.mxu0 %v1808
    %1810 = vmatprep.subr.mxu0 0.0
    %v1811 = vand.u32 %v1212, 4294901760
    %1812 = vmatpush1.msra.mxu0 %v1811
    %1813 = vmatprep.subr.mxu0 0.0
    %v1814 = vand.u32 %v1213, 4294901760
    %1815 = vmatpush1.msra.mxu0 %v1814
    %1816 = vmatprep.subr.mxu0 0.0
    %v1817 = vand.u32 %v1214, 4294901760
    %1818 = vmatpush1.msra.mxu0 %v1817
    %1819 = vmatprep.subr.mxu0 0.0
    %v1820 = vand.u32 %v1215, 4294901760
    %1821 = vmatpush1.msra.mxu0 %v1820
    %1822 = vmatprep.subr.mxu0 0.0
    %v1823 = vand.u32 %v1216, 4294901760
    %1824 = vmatpush1.msra.mxu0 %v1823
    %1825 = vmatprep.subr.mxu0 0.0
    %v1826 = vand.u32 %v1217, 4294901760
    %1827 = vmatpush1.msra.mxu0 %v1826
    %1828 = vmatprep.subr.mxu0 0.0
    %1829 = vmatpush1.msra.mxu0 0.0
    %1830 = vmatprep.subr.mxu0 0.0
    %1831 = vmatpush1.msra.mxu0 0.0
    %1832 = vmatprep.subr.mxu0 0.0
    %1833 = vmatpush1.msra.mxu0 0.0
    %1834 = vmatprep.subr.mxu0 0.0
    %1835 = vmatpush1.msra.mxu0 0.0
    %1836 = vmatprep.subr.mxu0 0.0
    %1837 = vmatpush1.msra.mxu0 0.0
    %1838 = vmatprep.subr.mxu0 0.0
    %1839 = vmatpush1.msra.mxu0 0.0
    %1840 = vmatprep.subr.mxu0 0.0
    %1841 = vmatpush1.msra.mxu0 0.0
    %1842 = vmatprep.subr.mxu0 0.0
    %1843 = vmatpush1.msra.mxu0 0.0
    %1844 = vmatprep.subr.mxu0 0.0
    %1845 = vmatpush1.msra.mxu0 0.0
    %1846 = vmatprep.subr.mxu0 0.0
    %1847 = vmatpush1.msra.mxu0 0.0
    %1848 = vmatprep.subr.mxu0 0.0
    %1849 = vmatpush1.msra.mxu0 0.0
    %1850 = vmatprep.subr.mxu0 0.0
    %1851 = vmatpush1.msra.mxu0 0.0
    %1852 = vmatprep.subr.mxu0 0.0
    %1853 = vmatpush1.msra.mxu0 0.0
    %1854 = vmatprep.subr.mxu0 0.0
    %1855 = vmatpush1.msra.mxu0 0.0
    %1856 = vmatprep.subr.mxu0 0.0
    %1857 = vmatpush1.msra.mxu0 0.0
    %1858 = vmatprep.subr.mxu0 0.0
    %1859 = vmatpush1.msra.mxu0 0.0
    %1860 = vmatprep.mubr.f32.mxu0 0.0
    %v1861 = vand.u32 %v1200, 4294901760
    %1862 = vmatmul.mubr.f32.gmra.mrb[0].mxu0 %v1861
    %v1863 = vpop.f32.mrb[0].mxu0
    %v1864 = vadd.f32 %v1777, %v1863
    %v1865 = vpop.f32.mrb[0].mxu0
    %1866 = vdwg.mxu0
    %v1867 = vmax.f32 %v1864, 0.0
    %s1868 = scalar_lea.vmem [#allocation7], 256
    %v1869 = vld [vmem:[%s1868] sm:$0xff]
    %v1870 = vld [vmem:[%s1868 + $0x8] sm:$0xff]
    %v1871 = vld [vmem:[%s1868 + $0x10] sm:$0xff]
    %v1872 = vld [vmem:[%s1868 + $0x18] sm:$0xff]
    %v1873 = vld [vmem:[%s1868 + $0x20] sm:$0xff]
    %v1874 = vld [vmem:[%s1868 + $0x28] sm:$0xff]
    %v1875 = vld [vmem:[%s1868 + $0x30] sm:$0xff]
    %v1876 = vld [vmem:[%s1868 + $0x38] sm:$0xff]
    %v1877 = vld [vmem:[%s1868 + $0x40] sm:$0xff]
    %v1878 = vld [vmem:[%s1868 + $0x48] sm:$0xff]
    %v1879 = vld [vmem:[%s1868 + $0x50] sm:$0xff]
    %v1880 = vld [vmem:[%s1868 + $0x58] sm:$0xff]
    %v1881 = vld [vmem:[%s1868 + $0x60] sm:$0xff]
    %v1882 = vld [vmem:[%s1868 + $0x68] sm:$0xff]
    %v1883 = vld [vmem:[%s1868 + $0x70] sm:$0xff]
    %v1884 = vld [vmem:[%s1868 + $0x78] sm:$0xff]
    %s1885 = scalar_lea.vmem %s3, 3
    %v1886 = vld [vmem:[%s1885] sm:$0x1]
    %v1888 = vlaneseq
    %v1889 = vshrl.u32 %v1888, 7
    %v1890 = vsub.s32 0, %v1889
    %v1891 = vrot.slane %v1886, %v1890
    %1893 = vmatprep.subr.mxu0 0.0
    %v1894 = vand.u32 %v1869, 4294901760
    %1895 = vmatpush1.msra.mxu0 %v1894
    %1896 = vmatprep.subr.mxu0 0.0
    %v1897 = vand.u32 %v1870, 4294901760
    %1898 = vmatpush1.msra.mxu0 %v1897
    %1899 = vmatprep.subr.mxu0 0.0
    %v1900 = vand.u32 %v1871, 4294901760
    %1901 = vmatpush1.msra.mxu0 %v1900
    %1902 = vmatprep.subr.mxu0 0.0
    %v1903 = vand.u32 %v1872, 4294901760
    %1904 = vmatpush1.msra.mxu0 %v1903
    %1905 = vmatprep.subr.mxu0 0.0
    %v1906 = vand.u32 %v1873, 4294901760
    %1907 = vmatpush1.msra.mxu0 %v1906
    %1908 = vmatprep.subr.mxu0 0.0
    %v1909 = vand.u32 %v1874, 4294901760
    %1910 = vmatpush1.msra.mxu0 %v1909
    %1911 = vmatprep.subr.mxu0 0.0
    %v1912 = vand.u32 %v1875, 4294901760
    %1913 = vmatpush1.msra.mxu0 %v1912
    %1914 = vmatprep.subr.mxu0 0.0
    %v1915 = vand.u32 %v1876, 4294901760
    %1916 = vmatpush1.msra.mxu0 %v1915
    %1917 = vmatprep.subr.mxu0 0.0
    %v1918 = vand.u32 %v1877, 4294901760
    %1919 = vmatpush1.msra.mxu0 %v1918
    %1920 = vmatprep.subr.mxu0 0.0
    %v1921 = vand.u32 %v1878, 4294901760
    %1922 = vmatpush1.msra.mxu0 %v1921
    %1923 = vmatprep.subr.mxu0 0.0
    %v1924 = vand.u32 %v1879, 4294901760
    %1925 = vmatpush1.msra.mxu0 %v1924
    %1926 = vmatprep.subr.mxu0 0.0
    %v1927 = vand.u32 %v1880, 4294901760
    %1928 = vmatpush1.msra.mxu0 %v1927
    %1929 = vmatprep.subr.mxu0 0.0
    %v1930 = vand.u32 %v1881, 4294901760
    %1931 = vmatpush1.msra.mxu0 %v1930
    %1932 = vmatprep.subr.mxu0 0.0
    %v1933 = vand.u32 %v1882, 4294901760
    %1934 = vmatpush1.msra.mxu0 %v1933
    %1935 = vmatprep.subr.mxu0 0.0
    %v1936 = vand.u32 %v1883, 4294901760
    %1937 = vmatpush1.msra.mxu0 %v1936
    %1938 = vmatprep.subr.mxu0 0.0
    %v1939 = vand.u32 %v1884, 4294901760
    %1940 = vmatpush1.msra.mxu0 %v1939
    %1941 = vmatprep.subr.mxu0 0.0
    %1942 = vmatpush1.msra.mxu0 0.0
    %1943 = vmatprep.subr.mxu0 0.0
    %1944 = vmatpush1.msra.mxu0 0.0
    %1945 = vmatprep.subr.mxu0 0.0
    %1946 = vmatpush1.msra.mxu0 0.0
    %1947 = vmatprep.subr.mxu0 0.0
    %1948 = vmatpush1.msra.mxu0 0.0
    %1949 = vmatprep.subr.mxu0 0.0
    %1950 = vmatpush1.msra.mxu0 0.0
    %1951 = vmatprep.subr.mxu0 0.0
    %1952 = vmatpush1.msra.mxu0 0.0
    %1953 = vmatprep.subr.mxu0 0.0
    %1954 = vmatpush1.msra.mxu0 0.0
    %1955 = vmatprep.subr.mxu0 0.0
    %1956 = vmatpush1.msra.mxu0 0.0
    %1957 = vmatprep.subr.mxu0 0.0
    %1958 = vmatpush1.msra.mxu0 0.0
    %1959 = vmatprep.subr.mxu0 0.0
    %1960 = vmatpush1.msra.mxu0 0.0
    %1961 = vmatprep.subr.mxu0 0.0
    %1962 = vmatpush1.msra.mxu0 0.0
    %1963 = vmatprep.subr.mxu0 0.0
    %1964 = vmatpush1.msra.mxu0 0.0
    %1965 = vmatprep.subr.mxu0 0.0
    %1966 = vmatpush1.msra.mxu0 0.0
    %1967 = vmatprep.subr.mxu0 0.0
    %1968 = vmatpush1.msra.mxu0 0.0
    %1969 = vmatprep.subr.mxu0 0.0
    %1970 = vmatpush1.msra.mxu0 0.0
    %1971 = vmatprep.subr.mxu0 0.0
    %1972 = vmatpush1.msra.mxu0 0.0
    %1973 = vmatprep.mubr.f32.mxu0 0.0
    %v1974 = vand.u32 %v1867, 4294901760
    %v1975 = vsub.f32 %v1867, %v1974
    %v1976 = vand.u32 %v1975, 4294901760
    %v1977 = vsub.f32 %v1975, %v1976
    %v1978 = vand.u32 %v1977, 4294901760
    %1979 = vmatmul.mubr.f32.gmra.mrb[0].mxu0 %v1978
    %v1980 = vpop.f32.mrb[0].mxu0
    %v1981 = vadd.f32 %v1891, %v1980
    %v1982 = vpop.f32.mrb[0].mxu0
    %1983 = vdwg.mxu0
    %1984 = vmatprep.subr.mxu0 0.0
    %v1985 = vand.u32 %v1869, 4294901760
    %v1986 = vsub.f32 %v1869, %v1985
    %v1987 = vand.u32 %v1986, 4294901760
    %v1988 = vsub.f32 %v1986, %v1987
    %v1989 = vand.u32 %v1988, 4294901760
    %1990 = vmatpush1.msra.mxu0 %v1989
    %1991 = vmatprep.subr.mxu0 0.0
    %v1992 = vand.u32 %v1870, 4294901760
    %v1993 = vsub.f32 %v1870, %v1992
    %v1994 = vand.u32 %v1993, 4294901760
    %v1995 = vsub.f32 %v1993, %v1994
    %v1996 = vand.u32 %v1995, 4294901760
    %1997 = vmatpush1.msra.mxu0 %v1996
    %1998 = vmatprep.subr.mxu0 0.0
    %v1999 = vand.u32 %v1871, 4294901760
    %v2000 = vsub.f32 %v1871, %v1999
    %v2001 = vand.u32 %v2000, 4294901760
    %v2002 = vsub.f32 %v2000, %v2001
    %v2003 = vand.u32 %v2002, 4294901760
    %2004 = vmatpush1.msra.mxu0 %v2003
    %2005 = vmatprep.subr.mxu0 0.0
    %v2006 = vand.u32 %v1872, 4294901760
    %v2007 = vsub.f32 %v1872, %v2006
    %v2008 = vand.u32 %v2007, 4294901760
    %v2009 = vsub.f32 %v2007, %v2008
    %v2010 = vand.u32 %v2009, 4294901760
    %2011 = vmatpush1.msra.mxu0 %v2010
    %2012 = vmatprep.subr.mxu0 0.0
    %v2013 = vand.u32 %v1873, 4294901760
    %v2014 = vsub.f32 %v1873, %v2013
    %v2015 = vand.u32 %v2014, 4294901760
    %v2016 = vsub.f32 %v2014, %v2015
    %v2017 = vand.u32 %v2016, 4294901760
    %2018 = vmatpush1.msra.mxu0 %v2017
    %2019 = vmatprep.subr.mxu0 0.0
    %v2020 = vand.u32 %v1874, 4294901760
    %v2021 = vsub.f32 %v1874, %v2020
    %v2022 = vand.u32 %v2021, 4294901760
    %v2023 = vsub.f32 %v2021, %v2022
    %v2024 = vand.u32 %v2023, 4294901760
    %2025 = vmatpush1.msra.mxu0 %v2024
    %2026 = vmatprep.subr.mxu0 0.0
    %v2027 = vand.u32 %v1875, 4294901760
    %v2028 = vsub.f32 %v1875, %v2027
    %v2029 = vand.u32 %v2028, 4294901760
    %v2030 = vsub.f32 %v2028, %v2029
    %v2031 = vand.u32 %v2030, 4294901760
    %2032 = vmatpush1.msra.mxu0 %v2031
    %2033 = vmatprep.subr.mxu0 0.0
    %v2034 = vand.u32 %v1876, 4294901760
    %v2035 = vsub.f32 %v1876, %v2034
    %v2036 = vand.u32 %v2035, 4294901760
    %v2037 = vsub.f32 %v2035, %v2036
    %v2038 = vand.u32 %v2037, 4294901760
    %2039 = vmatpush1.msra.mxu0 %v2038
    %2040 = vmatprep.subr.mxu0 0.0
    %v2041 = vand.u32 %v1877, 4294901760
    %v2042 = vsub.f32 %v1877, %v2041
    %v2043 = vand.u32 %v2042, 4294901760
    %v2044 = vsub.f32 %v2042, %v2043
    %v2045 = vand.u32 %v2044, 4294901760
    %2046 = vmatpush1.msra.mxu0 %v2045
    %2047 = vmatprep.subr.mxu0 0.0
    %v2048 = vand.u32 %v1878, 4294901760
    %v2049 = vsub.f32 %v1878, %v2048
    %v2050 = vand.u32 %v2049, 4294901760
    %v2051 = vsub.f32 %v2049, %v2050
    %v2052 = vand.u32 %v2051, 4294901760
    %2053 = vmatpush1.msra.mxu0 %v2052
    %2054 = vmatprep.subr.mxu0 0.0
    %v2055 = vand.u32 %v1879, 4294901760
    %v2056 = vsub.f32 %v1879, %v2055
    %v2057 = vand.u32 %v2056, 4294901760
    %v2058 = vsub.f32 %v2056, %v2057
    %v2059 = vand.u32 %v2058, 4294901760
    %2060 = vmatpush1.msra.mxu0 %v2059
    %2061 = vmatprep.subr.mxu0 0.0
    %v2062 = vand.u32 %v1880, 4294901760
    %v2063 = vsub.f32 %v1880, %v2062
    %v2064 = vand.u32 %v2063, 4294901760
    %v2065 = vsub.f32 %v2063, %v2064
    %v2066 = vand.u32 %v2065, 4294901760
    %2067 = vmatpush1.msra.mxu0 %v2066
    %2068 = vmatprep.subr.mxu0 0.0
    %v2069 = vand.u32 %v1881, 4294901760
    %v2070 = vsub.f32 %v1881, %v2069
    %v2071 = vand.u32 %v2070, 4294901760
    %v2072 = vsub.f32 %v2070, %v2071
    %v2073 = vand.u32 %v2072, 4294901760
    %2074 = vmatpush1.msra.mxu0 %v2073
    %2075 = vmatprep.subr.mxu0 0.0
    %v2076 = vand.u32 %v1882, 4294901760
    %v2077 = vsub.f32 %v1882, %v2076
    %v2078 = vand.u32 %v2077, 4294901760
    %v2079 = vsub.f32 %v2077, %v2078
    %v2080 = vand.u32 %v2079, 4294901760
    %2081 = vmatpush1.msra.mxu0 %v2080
    %2082 = vmatprep.subr.mxu0 0.0
    %v2083 = vand.u32 %v1883, 4294901760
    %v2084 = vsub.f32 %v1883, %v2083
    %v2085 = vand.u32 %v2084, 4294901760
    %v2086 = vsub.f32 %v2084, %v2085
    %v2087 = vand.u32 %v2086, 4294901760
    %2088 = vmatpush1.msra.mxu0 %v2087
    %2089 = vmatprep.subr.mxu0 0.0
    %v2090 = vand.u32 %v1884, 4294901760
    %v2091 = vsub.f32 %v1884, %v2090
    %v2092 = vand.u32 %v2091, 4294901760
    %v2093 = vsub.f32 %v2091, %v2092
    %v2094 = vand.u32 %v2093, 4294901760
    %2095 = vmatpush1.msra.mxu0 %v2094
    %2096 = vmatprep.subr.mxu0 0.0
    %2097 = vmatpush1.msra.mxu0 0.0
    %2098 = vmatprep.subr.mxu0 0.0
    %2099 = vmatpush1.msra.mxu0 0.0
    %2100 = vmatprep.subr.mxu0 0.0
    %2101 = vmatpush1.msra.mxu0 0.0
    %2102 = vmatprep.subr.mxu0 0.0
    %2103 = vmatpush1.msra.mxu0 0.0
    %2104 = vmatprep.subr.mxu0 0.0
    %2105 = vmatpush1.msra.mxu0 0.0
    %2106 = vmatprep.subr.mxu0 0.0
    %2107 = vmatpush1.msra.mxu0 0.0
    %2108 = vmatprep.subr.mxu0 0.0
    %2109 = vmatpush1.msra.mxu0 0.0
    %2110 = vmatprep.subr.mxu0 0.0
    %2111 = vmatpush1.msra.mxu0 0.0
    %2112 = vmatprep.subr.mxu0 0.0
    %2113 = vmatpush1.msra.mxu0 0.0
    %2114 = vmatprep.subr.mxu0 0.0
    %2115 = vmatpush1.msra.mxu0 0.0
    %2116 = vmatprep.subr.mxu0 0.0
    %2117 = vmatpush1.msra.mxu0 0.0
    %2118 = vmatprep.subr.mxu0 0.0
    %2119 = vmatpush1.msra.mxu0 0.0
    %2120 = vmatprep.subr.mxu0 0.0
    %2121 = vmatpush1.msra.mxu0 0.0
    %2122 = vmatprep.subr.mxu0 0.0
    %2123 = vmatpush1.msra.mxu0 0.0
    %2124 = vmatprep.subr.mxu0 0.0
    %2125 = vmatpush1.msra.mxu0 0.0
    %2126 = vmatprep.subr.mxu0 0.0
    %2127 = vmatpush1.msra.mxu0 0.0
    %2128 = vmatprep.mubr.f32.mxu0 0.0
    %v2129 = vand.u32 %v1867, 4294901760
    %2130 = vmatmul.mubr.f32.gmra.mrb[0].mxu0 %v2129
    %v2131 = vpop.f32.mrb[0].mxu0
    %v2132 = vadd.f32 %v1981, %v2131
    %v2133 = vpop.f32.mrb[0].mxu0
    %2134 = vdwg.mxu0
    %2135 = vmatprep.subr.mxu0 0.0
    %v2136 = vand.u32 %v1869, 4294901760
    %v2137 = vsub.f32 %v1869, %v2136
    %2138 = vmatpush1.msra.mxu0 %v2137
    %2139 = vmatprep.subr.mxu0 0.0
    %v2140 = vand.u32 %v1870, 4294901760
    %v2141 = vsub.f32 %v1870, %v2140
    %2142 = vmatpush1.msra.mxu0 %v2141
    %2143 = vmatprep.subr.mxu0 0.0
    %v2144 = vand.u32 %v1871, 4294901760
    %v2145 = vsub.f32 %v1871, %v2144
    %2146 = vmatpush1.msra.mxu0 %v2145
    %2147 = vmatprep.subr.mxu0 0.0
    %v2148 = vand.u32 %v1872, 4294901760
    %v2149 = vsub.f32 %v1872, %v2148
    %2150 = vmatpush1.msra.mxu0 %v2149
    %2151 = vmatprep.subr.mxu0 0.0
    %v2152 = vand.u32 %v1873, 4294901760
    %v2153 = vsub.f32 %v1873, %v2152
    %2154 = vmatpush1.msra.mxu0 %v2153
    %2155 = vmatprep.subr.mxu0 0.0
    %v2156 = vand.u32 %v1874, 4294901760
    %v2157 = vsub.f32 %v1874, %v2156
    %2158 = vmatpush1.msra.mxu0 %v2157
    %2159 = vmatprep.subr.mxu0 0.0
    %v2160 = vand.u32 %v1875, 4294901760
    %v2161 = vsub.f32 %v1875, %v2160
    %2162 = vmatpush1.msra.mxu0 %v2161
    %2163 = vmatprep.subr.mxu0 0.0
    %v2164 = vand.u32 %v1876, 4294901760
    %v2165 = vsub.f32 %v1876, %v2164
    %2166 = vmatpush1.msra.mxu0 %v2165
    %2167 = vmatprep.subr.mxu0 0.0
    %v2168 = vand.u32 %v1877, 4294901760
    %v2169 = vsub.f32 %v1877, %v2168
    %2170 = vmatpush1.msra.mxu0 %v2169
    %2171 = vmatprep.subr.mxu0 0.0
    %v2172 = vand.u32 %v1878, 4294901760
    %v2173 = vsub.f32 %v1878, %v2172
    %2174 = vmatpush1.msra.mxu0 %v2173
    %2175 = vmatprep.subr.mxu0 0.0
    %v2176 = vand.u32 %v1879, 4294901760
    %v2177 = vsub.f32 %v1879, %v2176
    %2178 = vmatpush1.msra.mxu0 %v2177
    %2179 = vmatprep.subr.mxu0 0.0
    %v2180 = vand.u32 %v1880, 4294901760
    %v2181 = vsub.f32 %v1880, %v2180
    %2182 = vmatpush1.msra.mxu0 %v2181
    %2183 = vmatprep.subr.mxu0 0.0
    %v2184 = vand.u32 %v1881, 4294901760
    %v2185 = vsub.f32 %v1881, %v2184
    %2186 = vmatpush1.msra.mxu0 %v2185
    %2187 = vmatprep.subr.mxu0 0.0
    %v2188 = vand.u32 %v1882, 4294901760
    %v2189 = vsub.f32 %v1882, %v2188
    %2190 = vmatpush1.msra.mxu0 %v2189
    %2191 = vmatprep.subr.mxu0 0.0
    %v2192 = vand.u32 %v1883, 4294901760
    %v2193 = vsub.f32 %v1883, %v2192
    %2194 = vmatpush1.msra.mxu0 %v2193
    %2195 = vmatprep.subr.mxu0 0.0
    %v2196 = vand.u32 %v1884, 4294901760
    %v2197 = vsub.f32 %v1884, %v2196
    %2198 = vmatpush1.msra.mxu0 %v2197
    %2199 = vmatprep.subr.mxu0 0.0
    %2200 = vmatpush1.msra.mxu0 0.0
    %2201 = vmatprep.subr.mxu0 0.0
    %2202 = vmatpush1.msra.mxu0 0.0
    %2203 = vmatprep.subr.mxu0 0.0
    %2204 = vmatpush1.msra.mxu0 0.0
    %2205 = vmatprep.subr.mxu0 0.0
    %2206 = vmatpush1.msra.mxu0 0.0
    %2207 = vmatprep.subr.mxu0 0.0
    %2208 = vmatpush1.msra.mxu0 0.0
    %2209 = vmatprep.subr.mxu0 0.0
    %2210 = vmatpush1.msra.mxu0 0.0
    %2211 = vmatprep.subr.mxu0 0.0
    %2212 = vmatpush1.msra.mxu0 0.0
    %2213 = vmatprep.subr.mxu0 0.0
    %2214 = vmatpush1.msra.mxu0 0.0
    %2215 = vmatprep.subr.mxu0 0.0
    %2216 = vmatpush1.msra.mxu0 0.0
    %2217 = vmatprep.subr.mxu0 0.0
    %2218 = vmatpush1.msra.mxu0 0.0
    %2219 = vmatprep.subr.mxu0 0.0
    %2220 = vmatpush1.msra.mxu0 0.0
    %2221 = vmatprep.subr.mxu0 0.0
    %2222 = vmatpush1.msra.mxu0 0.0
    %2223 = vmatprep.subr.mxu0 0.0
    %2224 = vmatpush1.msra.mxu0 0.0
    %2225 = vmatprep.subr.mxu0 0.0
    %2226 = vmatpush1.msra.mxu0 0.0
    %2227 = vmatprep.subr.mxu0 0.0
    %2228 = vmatpush1.msra.mxu0 0.0
    %2229 = vmatprep.subr.mxu0 0.0
    %2230 = vmatpush1.msra.mxu0 0.0
    %2231 = vmatprep.mubr.f32.mxu0 0.0
    %v2232 = vand.u32 %v1867, 4294901760
    %v2233 = vsub.f32 %v1867, %v2232
    %2234 = vmatmul.mubr.f32.gmra.mrb[0].mxu0 %v2233
    %v2235 = vpop.f32.mrb[0].mxu0
    %v2236 = vadd.f32 %v2132, %v2235
    %v2237 = vpop.f32.mrb[0].mxu0
    %2238 = vdwg.mxu0
    %2239 = vmatprep.subr.mxu0 0.0
    %v2240 = vand.u32 %v1869, 4294901760
    %2241 = vmatpush1.msra.mxu0 %v2240
    %2242 = vmatprep.subr.mxu0 0.0
    %v2243 = vand.u32 %v1870, 4294901760
    %2244 = vmatpush1.msra.mxu0 %v2243
    %2245 = vmatprep.subr.mxu0 0.0
    %v2246 = vand.u32 %v1871, 4294901760
    %2247 = vmatpush1.msra.mxu0 %v2246
    %2248 = vmatprep.subr.mxu0 0.0
    %v2249 = vand.u32 %v1872, 4294901760
    %2250 = vmatpush1.msra.mxu0 %v2249
    %2251 = vmatprep.subr.mxu0 0.0
    %v2252 = vand.u32 %v1873, 4294901760
    %2253 = vmatpush1.msra.mxu0 %v2252
    %2254 = vmatprep.subr.mxu0 0.0
    %v2255 = vand.u32 %v1874, 4294901760
    %2256 = vmatpush1.msra.mxu0 %v2255
    %2257 = vmatprep.subr.mxu0 0.0
    %v2258 = vand.u32 %v1875, 4294901760
    %2259 = vmatpush1.msra.mxu0 %v2258
    %2260 = vmatprep.subr.mxu0 0.0
    %v2261 = vand.u32 %v1876, 4294901760
    %2262 = vmatpush1.msra.mxu0 %v2261
    %2263 = vmatprep.subr.mxu0 0.0
    %v2264 = vand.u32 %v1877, 4294901760
    %2265 = vmatpush1.msra.mxu0 %v2264
    %2266 = vmatprep.subr.mxu0 0.0
    %v2267 = vand.u32 %v1878, 4294901760
    %2268 = vmatpush1.msra.mxu0 %v2267
    %2269 = vmatprep.subr.mxu0 0.0
    %v2270 = vand.u32 %v1879, 4294901760
    %2271 = vmatpush1.msra.mxu0 %v2270
    %2272 = vmatprep.subr.mxu0 0.0
    %v2273 = vand.u32 %v1880, 4294901760
    %2274 = vmatpush1.msra.mxu0 %v2273
    %2275 = vmatprep.subr.mxu0 0.0
    %v2276 = vand.u32 %v1881, 4294901760
    %2277 = vmatpush1.msra.mxu0 %v2276
    %2278 = vmatprep.subr.mxu0 0.0
    %v2279 = vand.u32 %v1882, 4294901760
    %2280 = vmatpush1.msra.mxu0 %v2279
    %2281 = vmatprep.subr.mxu0 0.0
    %v2282 = vand.u32 %v1883, 4294901760
    %2283 = vmatpush1.msra.mxu0 %v2282
    %2284 = vmatprep.subr.mxu0 0.0
    %v2285 = vand.u32 %v1884, 4294901760
    %2286 = vmatpush1.msra.mxu0 %v2285
    %2287 = vmatprep.subr.mxu0 0.0
    %2288 = vmatpush1.msra.mxu0 0.0
    %2289 = vmatprep.subr.mxu0 0.0
    %2290 = vmatpush1.msra.mxu0 0.0
    %2291 = vmatprep.subr.mxu0 0.0
    %2292 = vmatpush1.msra.mxu0 0.0
    %2293 = vmatprep.subr.mxu0 0.0
    %2294 = vmatpush1.msra.mxu0 0.0
    %2295 = vmatprep.subr.mxu0 0.0
    %2296 = vmatpush1.msra.mxu0 0.0
    %2297 = vmatprep.subr.mxu0 0.0
    %2298 = vmatpush1.msra.mxu0 0.0
    %2299 = vmatprep.subr.mxu0 0.0
    %2300 = vmatpush1.msra.mxu0 0.0
    %2301 = vmatprep.subr.mxu0 0.0
    %2302 = vmatpush1.msra.mxu0 0.0
    %2303 = vmatprep.subr.mxu0 0.0
    %2304 = vmatpush1.msra.mxu0 0.0
    %2305 = vmatprep.subr.mxu0 0.0
    %2306 = vmatpush1.msra.mxu0 0.0
    %2307 = vmatprep.subr.mxu0 0.0
    %2308 = vmatpush1.msra.mxu0 0.0
    %2309 = vmatprep.subr.mxu0 0.0
    %2310 = vmatpush1.msra.mxu0 0.0
    %2311 = vmatprep.subr.mxu0 0.0
    %2312 = vmatpush1.msra.mxu0 0.0
    %2313 = vmatprep.subr.mxu0 0.0
    %2314 = vmatpush1.msra.mxu0 0.0
    %2315 = vmatprep.subr.mxu0 0.0
    %2316 = vmatpush1.msra.mxu0 0.0
    %2317 = vmatprep.subr.mxu0 0.0
    %2318 = vmatpush1.msra.mxu0 0.0
    %2319 = vmatprep.mubr.f32.mxu0 0.0
    %v2320 = vand.u32 %v1867, 4294901760
    %v2321 = vsub.f32 %v1867, %v2320
    %v2322 = vand.u32 %v2321, 4294901760
    %2323 = vmatmul.mubr.f32.gmra.mrb[0].mxu0 %v2322
    %v2324 = vpop.f32.mrb[0].mxu0
    %v2325 = vadd.f32 %v2236, %v2324
    %v2326 = vpop.f32.mrb[0].mxu0
    %2327 = vdwg.mxu0
    %2328 = vmatprep.subr.mxu0 0.0
    %v2329 = vand.u32 %v1869, 4294901760
    %v2330 = vsub.f32 %v1869, %v2329
    %v2331 = vand.u32 %v2330, 4294901760
    %2332 = vmatpush1.msra.mxu0 %v2331
    %2333 = vmatprep.subr.mxu0 0.0
    %v2334 = vand.u32 %v1870, 4294901760
    %v2335 = vsub.f32 %v1870, %v2334
    %v2336 = vand.u32 %v2335, 4294901760
    %2337 = vmatpush1.msra.mxu0 %v2336
    %2338 = vmatprep.subr.mxu0 0.0
    %v2339 = vand.u32 %v1871, 4294901760
    %v2340 = vsub.f32 %v1871, %v2339
    %v2341 = vand.u32 %v2340, 4294901760
    %2342 = vmatpush1.msra.mxu0 %v2341
    %2343 = vmatprep.subr.mxu0 0.0
    %v2344 = vand.u32 %v1872, 4294901760
    %v2345 = vsub.f32 %v1872, %v2344
    %v2346 = vand.u32 %v2345, 4294901760
    %2347 = vmatpush1.msra.mxu0 %v2346
    %2348 = vmatprep.subr.mxu0 0.0
    %v2349 = vand.u32 %v1873, 4294901760
    %v2350 = vsub.f32 %v1873, %v2349
    %v2351 = vand.u32 %v2350, 4294901760
    %2352 = vmatpush1.msra.mxu0 %v2351
    %2353 = vmatprep.subr.mxu0 0.0
    %v2354 = vand.u32 %v1874, 4294901760
    %v2355 = vsub.f32 %v1874, %v2354
    %v2356 = vand.u32 %v2355, 4294901760
    %2357 = vmatpush1.msra.mxu0 %v2356
    %2358 = vmatprep.subr.mxu0 0.0
    %v2359 = vand.u32 %v1875, 4294901760
    %v2360 = vsub.f32 %v1875, %v2359
    %v2361 = vand.u32 %v2360, 4294901760
    %2362 = vmatpush1.msra.mxu0 %v2361
    %2363 = vmatprep.subr.mxu0 0.0
    %v2364 = vand.u32 %v1876, 4294901760
    %v2365 = vsub.f32 %v1876, %v2364
    %v2366 = vand.u32 %v2365, 4294901760
    %2367 = vmatpush1.msra.mxu0 %v2366
    %2368 = vmatprep.subr.mxu0 0.0
    %v2369 = vand.u32 %v1877, 4294901760
    %v2370 = vsub.f32 %v1877, %v2369
    %v2371 = vand.u32 %v2370, 4294901760
    %2372 = vmatpush1.msra.mxu0 %v2371
    %2373 = vmatprep.subr.mxu0 0.0
    %v2374 = vand.u32 %v1878, 4294901760
    %v2375 = vsub.f32 %v1878, %v2374
    %v2376 = vand.u32 %v2375, 4294901760
    %2377 = vmatpush1.msra.mxu0 %v2376
    %2378 = vmatprep.subr.mxu0 0.0
    %v2379 = vand.u32 %v1879, 4294901760
    %v2380 = vsub.f32 %v1879, %v2379
    %v2381 = vand.u32 %v2380, 4294901760
    %2382 = vmatpush1.msra.mxu0 %v2381
    %2383 = vmatprep.subr.mxu0 0.0
    %v2384 = vand.u32 %v1880, 4294901760
    %v2385 = vsub.f32 %v1880, %v2384
    %v2386 = vand.u32 %v2385, 4294901760
    %2387 = vmatpush1.msra.mxu0 %v2386
    %2388 = vmatprep.subr.mxu0 0.0
    %v2389 = vand.u32 %v1881, 4294901760
    %v2390 = vsub.f32 %v1881, %v2389
    %v2391 = vand.u32 %v2390, 4294901760
    %2392 = vmatpush1.msra.mxu0 %v2391
    %2393 = vmatprep.subr.mxu0 0.0
    %v2394 = vand.u32 %v1882, 4294901760
    %v2395 = vsub.f32 %v1882, %v2394
    %v2396 = vand.u32 %v2395, 4294901760
    %2397 = vmatpush1.msra.mxu0 %v2396
    %2398 = vmatprep.subr.mxu0 0.0
    %v2399 = vand.u32 %v1883, 4294901760
    %v2400 = vsub.f32 %v1883, %v2399
    %v2401 = vand.u32 %v2400, 4294901760
    %2402 = vmatpush1.msra.mxu0 %v2401
    %2403 = vmatprep.subr.mxu0 0.0
    %v2404 = vand.u32 %v1884, 4294901760
    %v2405 = vsub.f32 %v1884, %v2404
    %v2406 = vand.u32 %v2405, 4294901760
    %2407 = vmatpush1.msra.mxu0 %v2406
    %2408 = vmatprep.subr.mxu0 0.0
    %2409 = vmatpush1.msra.mxu0 0.0
    %2410 = vmatprep.subr.mxu0 0.0
    %2411 = vmatpush1.msra.mxu0 0.0
    %2412 = vmatprep.subr.mxu0 0.0
    %2413 = vmatpush1.msra.mxu0 0.0
    %2414 = vmatprep.subr.mxu0 0.0
    %2415 = vmatpush1.msra.mxu0 0.0
    %2416 = vmatprep.subr.mxu0 0.0
    %2417 = vmatpush1.msra.mxu0 0.0
    %2418 = vmatprep.subr.mxu0 0.0
    %2419 = vmatpush1.msra.mxu0 0.0
    %2420 = vmatprep.subr.mxu0 0.0
    %2421 = vmatpush1.msra.mxu0 0.0
    %2422 = vmatprep.subr.mxu0 0.0
    %2423 = vmatpush1.msra.mxu0 0.0
    %2424 = vmatprep.subr.mxu0 0.0
    %2425 = vmatpush1.msra.mxu0 0.0
    %2426 = vmatprep.subr.mxu0 0.0
    %2427 = vmatpush1.msra.mxu0 0.0
    %2428 = vmatprep.subr.mxu0 0.0
    %2429 = vmatpush1.msra.mxu0 0.0
    %2430 = vmatprep.subr.mxu0 0.0
    %2431 = vmatpush1.msra.mxu0 0.0
    %2432 = vmatprep.subr.mxu0 0.0
    %2433 = vmatpush1.msra.mxu0 0.0
    %2434 = vmatprep.subr.mxu0 0.0
    %2435 = vmatpush1.msra.mxu0 0.0
    %2436 = vmatprep.subr.mxu0 0.0
    %2437 = vmatpush1.msra.mxu0 0.0
    %2438 = vmatprep.subr.mxu0 0.0
    %2439 = vmatpush1.msra.mxu0 0.0
    %2440 = vmatprep.mubr.f32.mxu0 0.0
    %v2441 = vand.u32 %v1867, 4294901760
    %2442 = vmatmul.mubr.f32.gmra.mrb[0].mxu0 %v2441
    %v2443 = vpop.f32.mrb[0].mxu0
    %v2444 = vadd.f32 %v2325, %v2443
    %v2445 = vpop.f32.mrb[0].mxu0
    %2446 = vdwg.mxu0
    %2447 = vmatprep.subr.mxu0 0.0
    %v2448 = vand.u32 %v1869, 4294901760
    %2449 = vmatpush1.msra.mxu0 %v2448
    %2450 = vmatprep.subr.mxu0 0.0
    %v2451 = vand.u32 %v1870, 4294901760
    %2452 = vmatpush1.msra.mxu0 %v2451
    %2453 = vmatprep.subr.mxu0 0.0
    %v2454 = vand.u32 %v1871, 4294901760
    %2455 = vmatpush1.msra.mxu0 %v2454
    %2456 = vmatprep.subr.mxu0 0.0
    %v2457 = vand.u32 %v1872, 4294901760
    %2458 = vmatpush1.msra.mxu0 %v2457
    %2459 = vmatprep.subr.mxu0 0.0
    %v2460 = vand.u32 %v1873, 4294901760
    %2461 = vmatpush1.msra.mxu0 %v2460
    %2462 = vmatprep.subr.mxu0 0.0
    %v2463 = vand.u32 %v1874, 4294901760
    %2464 = vmatpush1.msra.mxu0 %v2463
    %2465 = vmatprep.subr.mxu0 0.0
    %v2466 = vand.u32 %v1875, 4294901760
    %2467 = vmatpush1.msra.mxu0 %v2466
    %2468 = vmatprep.subr.mxu0 0.0
    %v2469 = vand.u32 %v1876, 4294901760
    %2470 = vmatpush1.msra.mxu0 %v2469
    %2471 = vmatprep.subr.mxu0 0.0
    %v2472 = vand.u32 %v1877, 4294901760
    %2473 = vmatpush1.msra.mxu0 %v2472
    %2474 = vmatprep.subr.mxu0 0.0
    %v2475 = vand.u32 %v1878, 4294901760
    %2476 = vmatpush1.msra.mxu0 %v2475
    %2477 = vmatprep.subr.mxu0 0.0
    %v2478 = vand.u32 %v1879, 4294901760
    %2479 = vmatpush1.msra.mxu0 %v2478
    %2480 = vmatprep.subr.mxu0 0.0
    %v2481 = vand.u32 %v1880, 4294901760
    %2482 = vmatpush1.msra.mxu0 %v2481
    %2483 = vmatprep.subr.mxu0 0.0
    %v2484 = vand.u32 %v1881, 4294901760
    %2485 = vmatpush1.msra.mxu0 %v2484
    %2486 = vmatprep.subr.mxu0 0.0
    %v2487 = vand.u32 %v1882, 4294901760
    %2488 = vmatpush1.msra.mxu0 %v2487
    %2489 = vmatprep.subr.mxu0 0.0
    %v2490 = vand.u32 %v1883, 4294901760
    %2491 = vmatpush1.msra.mxu0 %v2490
    %2492 = vmatprep.subr.mxu0 0.0
    %v2493 = vand.u32 %v1884, 4294901760
    %2494 = vmatpush1.msra.mxu0 %v2493
    %2495 = vmatprep.subr.mxu0 0.0
    %2496 = vmatpush1.msra.mxu0 0.0
    %2497 = vmatprep.subr.mxu0 0.0
    %2498 = vmatpush1.msra.mxu0 0.0
    %2499 = vmatprep.subr.mxu0 0.0
    %2500 = vmatpush1.msra.mxu0 0.0
    %2501 = vmatprep.subr.mxu0 0.0
    %2502 = vmatpush1.msra.mxu0 0.0
    %2503 = vmatprep.subr.mxu0 0.0
    %2504 = vmatpush1.msra.mxu0 0.0
    %2505 = vmatprep.subr.mxu0 0.0
    %2506 = vmatpush1.msra.mxu0 0.0
    %2507 = vmatprep.subr.mxu0 0.0
    %2508 = vmatpush1.msra.mxu0 0.0
    %2509 = vmatprep.subr.mxu0 0.0
    %2510 = vmatpush1.msra.mxu0 0.0
    %2511 = vmatprep.subr.mxu0 0.0
    %2512 = vmatpush1.msra.mxu0 0.0
    %2513 = vmatprep.subr.mxu0 0.0
    %2514 = vmatpush1.msra.mxu0 0.0
    %2515 = vmatprep.subr.mxu0 0.0
    %2516 = vmatpush1.msra.mxu0 0.0
    %2517 = vmatprep.subr.mxu0 0.0
    %2518 = vmatpush1.msra.mxu0 0.0
    %2519 = vmatprep.subr.mxu0 0.0
    %2520 = vmatpush1.msra.mxu0 0.0
    %2521 = vmatprep.subr.mxu0 0.0
    %2522 = vmatpush1.msra.mxu0 0.0
    %2523 = vmatprep.subr.mxu0 0.0
    %2524 = vmatpush1.msra.mxu0 0.0
    %2525 = vmatprep.subr.mxu0 0.0
    %2526 = vmatpush1.msra.mxu0 0.0
    %2527 = vmatprep.mubr.f32.mxu0 0.0
    %v2528 = vand.u32 %v1867, 4294901760
    %2529 = vmatmul.mubr.f32.gmra.mrb[0].mxu0 %v2528
    %v2530 = vpop.f32.mrb[0].mxu0
    %v2531 = vadd.f32 %v2444, %v2530
    %v2532 = vpop.f32.mrb[0].mxu0
    %2533 = vdwg.mxu0
    %2534 = vst [vmem:[#allocation8] sm:$0xff] %v2531
    // Predicated region
    $region30: #{tpu_custom_call.1} parent=1 // pred_check
      _
    $region31: #{tpu_custom_call.1} parent=1 // pred_check_branch
      %2536 = sbr.rel (0) target = $region33
    $region32: #{tpu_custom_call.1} parent=1 // pred_region
      %s2538 = ssub.s32 128, 128
      %2539 = vsyncadd [#allocation4], %s2538
      %s2541 = sshll.u32 [#allocation8], 4
      %s2542 = int_to_ptr.vmem [resolvable:$true] %s2541
      %2544 = dma.vmem_to_hbm [thread:$0]  %s2542, 128, %s4, [#allocation4]
    $region33: #{tpu_custom_call.1} parent=1 // pred_fallthru
      _
    // Predicated region
    $region34: #{tpu_custom_call.1} parent=1 // pred_check
      _
    $region35: #{tpu_custom_call.1} parent=1 // pred_check_branch
      %2546 = sbr.rel (0) target = $region37
    $region36: #{tpu_custom_call.1} parent=1 // pred_region
      %2547 = dma.done [#allocation4], 128
    $region37: #{tpu_custom_call.1} parent=1 // pred_fallthru
      _
    %2548 = vsyncpa [#allocation3], 1
    %2549 = vsyncpa [#allocation6], 1
    %2550 = vsyncpa [#allocation4], 1

</llo_original>
